<compile_context>
chip_gen: v7x
topology: tpu7x:2x2x1
jax: 0.10.0
libtpu: 0.0.40
codegen_flags: <defaults>
</compile_context>

<pallas_src>
import functools
import math

import jax
import jax.numpy as jnp
from jax.experimental import pallas as pl
from jax.experimental.pallas import tpu as pltpu


def _round_up(x, m):
    return ((x + m - 1) // m) * m


def _vmem_limit_bytes():
    """Per-generation VMEM cap: 7/8 of physical, never above 112 MiB."""
    cap = None
    try:
        cap = getattr(pltpu.get_tpu_info(), "vmem_capacity_bytes", None)
    except Exception:
        cap = None
    if not cap:
        cap = 64 * 1024 * 1024  # conservative fallback (v7x physical)
    return min(int(cap) * 7 // 8, 112 * 1024 * 1024)


def _const_spec(shape):
    """BlockSpec for an array that is fully resident (constant block index)."""
    nd = len(shape)
    return pl.BlockSpec(shape, lambda *_: (0,) * nd)


def _pick_f_tile(F, target=2048):
    """Largest 128-multiple divisor of F not exceeding `target` (or F itself)."""
    if F <= target:
        return F
    ft = (target // 128) * 128
    while ft >= 128:
        if F % ft == 0:
            return ft
        ft -= 128
    return F


def _layer_norm(x, gamma, beta, eps):
    """Row-wise LayerNorm in fp32 with shifted (cancellation-safe) variance."""
    mean = jnp.mean(x, axis=-1, keepdims=True)
    xc = x - mean
    var = jnp.mean(xc * xc, axis=-1, keepdims=True)
    return xc * jax.lax.rsqrt(var + eps) * gamma + beta


# --------------------------------------------------------------------------
# Kernel 1: per-batch fused self-attention + out_proj + residual + LayerNorm1
# --------------------------------------------------------------------------
def _attn_ln1_kernel(qk_ref, src_ref, wqk_ref, bqk_ref, wv_ref, bv_ref,
                     wo_ref, bo_ref, g1_ref, be1_ref, o_ref,
                     *, nhead, head_dim, scale, eps, compute_dtype):
    cd = compute_dtype
    E = nhead * head_dim

    x_qk = qk_ref[0].astype(cd)                 # (L, E)  = src + pos (q / k path)
    x_src = src_ref[0]                          # (L, E)  = src (value + residual path)

    # Full-width fused Q/K projection: (L, E) @ (E, 2E) with f32 accumulation.
    qk = jnp.dot(x_qk, wqk_ref[...], preferred_element_type=jnp.float32)
    qk = qk + bqk_ref[...].astype(jnp.float32)
    q = qk[:, :E] * scale
    k = qk[:, E:]

    # Value projection: (L, E) @ (E, E).
    v = jnp.dot(x_src.astype(cd), wv_ref[...], preferred_element_type=jnp.float32)
    v = v + bv_ref[...].astype(jnp.float32)

    # Per-head scaled-dot-product attention (static loop, H known at trace time).
    outs = []
    for h in range(nhead):
        sl = slice(h * head_dim, (h + 1) * head_dim)
        q_h = q[:, sl].astype(cd)
        k_h = k[:, sl].astype(cd)
        v_h = v[:, sl].astype(cd)
        s = jax.lax.dot_general(q_h, k_h, (((1,), (1,)), ((), ())),
                                preferred_element_type=jnp.float32)   # (L, L)
        s = s - jnp.max(s, axis=-1, keepdims=True)
        p = jnp.exp(s)
        p = p * pl.reciprocal(jnp.sum(p, axis=-1, keepdims=True), approx=True)
        outs.append(jnp.dot(p.astype(cd), v_h,
                            preferred_element_type=jnp.float32))      # (L, Dh)
    o_cat = jnp.concatenate(outs, axis=-1)       # (L, E), PyTorch head order

    # Fused out_proj + residual + LayerNorm1 (all f32 elementwise).
    attn = jnp.dot(o_cat.astype(cd), wo_ref[...], preferred_element_type=jnp.float32)
    attn = attn + bo_ref[...].astype(jnp.float32)
    x = x_src.astype(jnp.float32) + attn         # dropout1 identity at inference
    x = _layer_norm(x, g1_ref[...].astype(jnp.float32),
                    be1_ref[...].astype(jnp.float32), eps)
    o_ref[0] = x.astype(o_ref.dtype)


# --------------------------------------------------------------------------
# Kernel 2: token-tiled FFN (linear1 -> ReLU -> linear2) + residual + LayerNorm2
# with an F-reduction grid axis and an f32 VMEM accumulator.
# --------------------------------------------------------------------------
def _ffn_ln2_kernel(x_ref, w1_ref, b1_ref, w2_ref, b2_ref, g2_ref, be2_ref,
                    o_ref, acc_ref, *, eps, compute_dtype):
    cd = compute_dtype
    f = pl.program_id(1)

    @pl.when(f == 0)
    def _():
        acc_ref[...] = jnp.zeros_like(acc_ref)

    h = jnp.dot(x_ref[...].astype(cd), w1_ref[...],
                preferred_element_type=jnp.float32)
    h = jnp.maximum(h + b1_ref[...].astype(jnp.float32), 0.0)   # ReLU
    acc_ref[...] += jnp.dot(h.astype(cd), w2_ref[...],
                            preferred_element_type=jnp.float32)

    @pl.when(f == pl.num_programs(1) - 1)
    def _():
        x = x_ref[...].astype(jnp.float32)
        y = x + acc_ref[...] + b2_ref[...].astype(jnp.float32)  # dropout/dropout2 identity
        y = _layer_norm(y, g2_ref[...].astype(jnp.float32),
                        be2_ref[...].astype(jnp.float32), eps)
        o_ref[...] = y.astype(o_ref.dtype)


def transformer_encoder_layer_forward(src, params, *, nhead, pos=None, tm=512,
                                      ln_eps=1e-5, compute_dtype=jnp.bfloat16):
    """Post-norm TransformerEncoderLayer forward (inference).  src: (L, N, E)."""
    L, N, E = src.shape
    H = nhead
    assert E % H == 0, "d_model must be divisible by nhead"
    Dh = E // H
    cd = compute_dtype
    vmem_limit = _vmem_limit_bytes()

    # ----- layout prep (cheap XLA transposes, fused by the compiler) -----
    qk_in = src if pos is None else src + pos         # q = k = with_pos_embed(src, pos)
    qk_nle = jnp.transpose(qk_in, (1, 0, 2))           # (N, L, E)
    src_nle = jnp.transpose(src, (1, 0, 2))            # value / residual path (no pos)

    in_w, in_b = params["in_proj_weight"], params["in_proj_bias"]
    w_qk = jnp.concatenate([in_w[:E].T, in_w[E:2 * E].T], axis=1).astype(cd)   # (E, 2E)
    b_qk = jnp.concatenate([in_b[:E], in_b[E:2 * E]]).reshape(1, 2 * E)
    w_v = in_w[2 * E:].T.astype(cd)                                            # (E, E)
    b_v = in_b[2 * E:].reshape(1, E)
    wo = params["out_proj_weight"].T.astype(cd)                                # (E, E)
    bo = params["out_proj_bias"].reshape(1, E)
    g1 = params["norm1_weight"].reshape(1, E)
    be1 = params["norm1_bias"].reshape(1, E)

    scale = 1.0 / math.sqrt(Dh)

    # ----- kernel 1: attention + out_proj + residual + LN1, lane-dense output -----
    x_ln1 = pl.pallas_call(
        functools.partial(_attn_ln1_kernel, nhead=H, head_dim=Dh, scale=scale,
                          eps=ln_eps, compute_dtype=cd),
        out_shape=jax.ShapeDtypeStruct((N, L, E), src.dtype),
        grid_spec=pltpu.PrefetchScalarGridSpec(
            num_scalar_prefetch=0,
            grid=(N,),
            in_specs=[
                pl.BlockSpec((1, L, E), lambda n: (n, 0, 0)),   # q/k input (src + pos)
                pl.BlockSpec((1, L, E), lambda n: (n, 0, 0)),   # value / residual (src)
                _const_spec((E, 2 * E)),                        # fused Wq|Wk (resident)
                _const_spec((1, 2 * E)),                        # bq|bk
                _const_spec((E, E)),                            # Wv
                _const_spec((1, E)),                            # bv
                _const_spec((E, E)),                            # out_proj weight
                _const_spec((1, E)),                            # out_proj bias
                _const_spec((1, E)),                            # norm1 gamma
                _const_spec((1, E)),                            # norm1 beta
            ],
            out_specs=pl.BlockSpec((1, L, E), lambda n: (n, 0, 0)),
        ),
        compiler_params=pltpu.CompilerParams(
            dimension_semantics=("parallel",),
            vmem_limit_bytes=vmem_limit),
    )(qk_nle, src_nle, w_qk, b_qk, w_v, b_v, wo, bo, g1, be1)

    # ----- kernel 2: token-tiled FFN + residual + LN2 (F reduction axis) -----
    T = N * L
    x2d = x_ln1.reshape(T, E)

    F = params["linear1_weight"].shape[0]
    w1 = params["linear1_weight"].T.astype(cd)          # (E, F)
    b1 = params["linear1_bias"].reshape(1, F)
    w2 = params["linear2_weight"].T.astype(cd)          # (F, E)
    b2 = params["linear2_bias"].reshape(1, E)
    g2 = params["norm2_weight"].reshape(1, E)
    be2 = params["norm2_bias"].reshape(1, E)

    # Token tile: aim for >= 4 grid steps (so each v7x TensorCore keeps its
    # BlockSpec pipeline fed), but never below 256 rows when T allows it.
    tm = max(8, (tm // 8) * 8)
    target = _round_up(-(-T // 4), 8)
    tm_eff = max(256, target) if T >= 512 else max(8, target)
    tm_eff = min(tm, tm_eff, _round_up(T, 8))
    T_pad = _round_up(T, tm_eff)
    if T_pad != T:
        x2d = jnp.pad(x2d, ((0, T_pad - T), (0, 0)))

    Ft = _pick_f_tile(F)
    n_f = F // Ft

    def w_spec(shape, index_map):
        # When F is not tiled the weight block never changes -> constant index.
        return _const_spec(shape) if n_f == 1 else pl.BlockSpec(shape, index_map)

    y2d = pl.pallas_call(
        functools.partial(_ffn_ln2_kernel, eps=ln_eps, compute_dtype=cd),
        out_shape=jax.ShapeDtypeStruct((T_pad, E), src.dtype),
        grid_spec=pltpu.PrefetchScalarGridSpec(
            num_scalar_prefetch=0,
            grid=(T_pad // tm_eff, n_f),
            in_specs=[
                pl.BlockSpec((tm_eff, E), lambda i, f: (i, 0)),  # post-LN1 tokens
                w_spec((E, Ft), lambda i, f: (0, f)),            # linear1 weight tile
                w_spec((1, Ft), lambda i, f: (0, f)),            # linear1 bias tile
                w_spec((Ft, E), lambda i, f: (f, 0)),            # linear2 weight tile
                _const_spec((1, E)),                             # linear2 bias
                _const_spec((1, E)),                             # norm2 gamma
                _const_spec((1, E)),                             # norm2 beta
            ],
            out_specs=pl.BlockSpec((tm_eff, E), lambda i, f: (i, 0)),
            scratch_shapes=[pltpu.VMEM((tm_eff, E), jnp.float32)],
        ),
        compiler_params=pltpu.CompilerParams(
            dimension_semantics=("parallel", "arbitrary"),
            vmem_limit_bytes=vmem_limit),
    )(x2d, w1, b1, w2, b2, g2, be2)

    y = y2d[:T].reshape(N, L, E)
    return jnp.transpose(y, (1, 0, 2))                   # back to (L, N, E)


# --------------------------------------------------------------------------
# Pure-JAX reference (mirrors torch forward_post, inference) and param init.
# --------------------------------------------------------------------------
def _ln_ref(x, gamma, beta, eps):
    mean = jnp.mean(x, axis=-1, keepdims=True)
    xc = x - mean
    var = jnp.mean(xc * xc, axis=-1, keepdims=True)
    return xc * jax.lax.rsqrt(var + eps) * gamma + beta


def _reference_forward(src, params, *, nhead, pos=None, eps=1e-5):
    L, N, E = src.shape
    H = nhead
    Dh = E // H
    qk = src if pos is None else src + pos
    w_in, b_in = params["in_proj_weight"], params["in_proj_bias"]
    q = qk @ w_in[:E].T + b_in[:E]
    k = qk @ w_in[E:2 * E].T + b_in[E:2 * E]
    v = src @ w_in[2 * E:].T + b_in[2 * E:]

    def split_heads(x):
        return jnp.transpose(x.reshape(L, N * H, Dh), (1, 0, 2))

    qh = split_heads(q) * (1.0 / math.sqrt(Dh))
    kh, vh = split_heads(k), split_heads(v)
    s = jnp.einsum("bld,bmd->blm", qh, kh)
    p = jax.nn.softmax(s, axis=-1)
    o = jnp.einsum("blm,bmd->bld", p, vh)
    o = jnp.transpose(o, (1, 0, 2)).reshape(L, N, E)
    attn = o @ params["out_proj_weight"].T + params["out_proj_bias"]
    x = _ln_ref(src + attn, params["norm1_weight"], params["norm1_bias"], eps)
    h = jnp.maximum(x @ params["linear1_weight"].T + params["linear1_bias"], 0.0)
    y = h @ params["linear2_weight"].T + params["linear2_bias"]
    return _ln_ref(x + y, params["norm2_weight"], params["norm2_bias"], eps)


def init_params(key, d_model, nhead, dim_feedforward):
    """Deterministic parameters mirroring the PyTorch module structure / init."""
    del nhead  # head split happens at forward time
    E, F = d_model, dim_feedforward
    ks = jax.random.split(key, 6)

    def unif(k, shape, bound):
        return jax.random.uniform(k, shape, jnp.float32, -bound, bound)

    xavier = math.sqrt(6.0 / (E + 3 * E))            # MultiheadAttention in_proj xavier_uniform_
    lin = lambda fan_in: 1.0 / math.sqrt(fan_in)     # nn.Linear default init bound
    return dict(
        in_proj_weight=unif(ks[0], (3 * E, E), xavier),
        in_proj_bias=jnp.zeros((3 * E,), jnp.float32),
        out_proj_weight=unif(ks[1], (E, E), lin(E)),
        out_proj_bias=jnp.zeros((E,), jnp.float32),
        linear1_weight=unif(ks[2], (F, E), lin(E)),
        linear1_bias=unif(ks[3], (F,), lin(E)),
        linear2_weight=unif(ks[4], (E, F), lin(F)),
        linear2_bias=unif(ks[5], (E,), lin(F)),
        norm1_weight=jnp.ones((E,), jnp.float32),
        norm1_bias=jnp.zeros((E,), jnp.float32),
        norm2_weight=jnp.ones((E,), jnp.float32),
        norm2_bias=jnp.zeros((E,), jnp.float32),
    )


if __name__ == "__main__":
    key = jax.random.PRNGKey(0)
    L, N, E, H, F = 8, 2, 32, 4, 64   # seq, batch, d_model, nhead, dim_feedforward

    k_x, k_pos, k_p = jax.random.split(key, 3)
    src = jax.random.normal(k_x, (L, N, E), jnp.float32)
    pos = jax.random.normal(k_pos, (L, N, E), jnp.float32)
    params = init_params(k_p, d_model=E, nhead=H, dim_feedforward=F)

    ref = _reference_forward(src, params, nhead=H, pos=pos)

    # f32 MXU-operand path (numerics check) and default bf16 path (perf config).
    y32 = transformer_encoder_layer_forward(src, params, nhead=H, pos=pos,
                                            compute_dtype=jnp.float32)
    y16 = transformer_encoder_layer_forward(src, params, nhead=H, pos=pos)
    jax.block_until_ready((y32, y16))

    assert y16.shape == (L, N, E) and y16.dtype == src.dtype
    assert bool(jnp.all(jnp.isfinite(y16))) and bool(jnp.all(jnp.isfinite(y32)))
    err32 = float(jnp.max(jnp.abs(y32 - ref)))
    err16 = float(jnp.max(jnp.abs(y16 - ref)))
    assert err32 < 2e-2, f"f32 path mismatch: {err32}"
    assert err16 < 3e-1, f"bf16 path mismatch: {err16}"
    print("KERNEL_OK")
</pallas_src>

<mosaic_0001>
module attributes {stable_mosaic.version = 11 : i64} {
  func.func @_attn_ln1_kernel(%arg0: i32, %arg1: memref<1x8x32xf32, #tpu.memory_space<vmem>>, %arg2: memref<1x8x32xf32, #tpu.memory_space<vmem>>, %arg3: memref<32x64xf32, #tpu.memory_space<vmem>>, %arg4: memref<1x64xf32, #tpu.memory_space<vmem>>, %arg5: memref<32x32xf32, #tpu.memory_space<vmem>>, %arg6: memref<1x32xf32, #tpu.memory_space<vmem>>, %arg7: memref<32x32xf32, #tpu.memory_space<vmem>>, %arg8: memref<1x32xf32, #tpu.memory_space<vmem>>, %arg9: memref<1x32xf32, #tpu.memory_space<vmem>>, %arg10: memref<1x32xf32, #tpu.memory_space<vmem>>, %arg11: memref<1x8x32xf32, #tpu.memory_space<vmem>>) attributes {dimension_semantics = [#tpu.dimension_semantics<parallel>], iteration_bounds = array<i64: 2>, scalar_prefetch = 0 : i64, scratch_operands = 0 : i64, tpu.core_type = #tpu.core_type<tc>, window_params = [{transform_indices = @transform_0, window_bounds = array<i64: 1, 8, 32>}, {transform_indices = @transform_1, window_bounds = array<i64: 1, 8, 32>}, {pipeline_mode = #tpu.pipeline_mode<synchronous>, transform_indices = @transform_2, window_bounds = array<i64: 32, 64>}, {pipeline_mode = #tpu.pipeline_mode<synchronous>, transform_indices = @transform_3, window_bounds = array<i64: 1, 64>}, {pipeline_mode = #tpu.pipeline_mode<synchronous>, transform_indices = @transform_4, window_bounds = array<i64: 32, 32>}, {pipeline_mode = #tpu.pipeline_mode<synchronous>, transform_indices = @transform_5, window_bounds = array<i64: 1, 32>}, {pipeline_mode = #tpu.pipeline_mode<synchronous>, transform_indices = @transform_6, window_bounds = array<i64: 32, 32>}, {pipeline_mode = #tpu.pipeline_mode<synchronous>, transform_indices = @transform_7, window_bounds = array<i64: 1, 32>}, {pipeline_mode = #tpu.pipeline_mode<synchronous>, transform_indices = @transform_8, window_bounds = array<i64: 1, 32>}, {pipeline_mode = #tpu.pipeline_mode<synchronous>, transform_indices = @transform_9, window_bounds = array<i64: 1, 32>}, {transform_indices = @transform_10, window_bounds = array<i64: 1, 8, 32>}]} {
    %c0 = arith.constant 0 : index
    %c0_0 = arith.constant 0 : index
    %c0_1 = arith.constant 0 : index
    %0 = vector.load %arg1[%c0, %c0_0, %c0_1] : memref<1x8x32xf32, #tpu.memory_space<vmem>>, vector<1x8x32xf32>
    %1 = vector.shape_cast %0 : vector<1x8x32xf32> to vector<8x32xf32>
    %c0_2 = arith.constant 0 : index
    %c0_3 = arith.constant 0 : index
    %c0_4 = arith.constant 0 : index
    %2 = vector.load %arg2[%c0_2, %c0_3, %c0_4] : memref<1x8x32xf32, #tpu.memory_space<vmem>>, vector<1x8x32xf32>
    %3 = vector.shape_cast %2 : vector<1x8x32xf32> to vector<8x32xf32>
    %c0_5 = arith.constant 0 : index
    %c0_6 = arith.constant 0 : index
    %4 = vector.load %arg3[%c0_5, %c0_6] : memref<32x64xf32, #tpu.memory_space<vmem>>, vector<32x64xf32>
    %cst = arith.constant dense<0.000000e+00> : vector<8x64xf32>
    %5 = tpu.matmul %1, %4, %cst {dimension_numbers = #tpu.dot_dimension_numbers<[1], [0], [0], [1], [0, 0, 1, 1], [], []>} : vector<8x32xf32>, vector<32x64xf32>, vector<8x64xf32> -> vector<8x64xf32>
    %c0_7 = arith.constant 0 : index
    %c0_8 = arith.constant 0 : index
    %6 = vector.load %arg4[%c0_7, %c0_8] : memref<1x64xf32, #tpu.memory_space<vmem>>, vector<1x64xf32>
    %7 = vector.broadcast %6 : vector<1x64xf32> to vector<8x64xf32>
    %8 = arith.addf %5, %7 : vector<8x64xf32>
    %9 = vector.extract_strided_slice %8 {offsets = [0, 0], sizes = [8, 32], strides = [1, 1]} : vector<8x64xf32> to vector<8x32xf32>
    %cst_9 = arith.constant 0.353553385 : f32
    %10 = vector.broadcast %cst_9 : f32 to vector<8x32xf32>
    %11 = arith.mulf %9, %10 : vector<8x32xf32>
    %12 = vector.extract_strided_slice %8 {offsets = [0, 32], sizes = [8, 32], strides = [1, 1]} : vector<8x64xf32> to vector<8x32xf32>
    %c0_10 = arith.constant 0 : index
    %c0_11 = arith.constant 0 : index
    %13 = vector.load %arg5[%c0_10, %c0_11] : memref<32x32xf32, #tpu.memory_space<vmem>>, vector<32x32xf32>
    %cst_12 = arith.constant dense<0.000000e+00> : vector<8x32xf32>
    %14 = tpu.matmul %3, %13, %cst_12 {dimension_numbers = #tpu.dot_dimension_numbers<[1], [0], [0], [1], [0, 0, 1, 1], [], []>} : vector<8x32xf32>, vector<32x32xf32>, vector<8x32xf32> -> vector<8x32xf32>
    %c0_13 = arith.constant 0 : index
    %c0_14 = arith.constant 0 : index
    %15 = vector.load %arg6[%c0_13, %c0_14] : memref<1x32xf32, #tpu.memory_space<vmem>>, vector<1x32xf32>
    %16 = vector.broadcast %15 : vector<1x32xf32> to vector<8x32xf32>
    %17 = arith.addf %14, %16 : vector<8x32xf32>
    %18 = vector.extract_strided_slice %11 {offsets = [0, 0], sizes = [8, 8], strides = [1, 1]} : vector<8x32xf32> to vector<8x8xf32>
    %19 = vector.extract_strided_slice %12 {offsets = [0, 0], sizes = [8, 8], strides = [1, 1]} : vector<8x32xf32> to vector<8x8xf32>
    %20 = vector.extract_strided_slice %17 {offsets = [0, 0], sizes = [8, 8], strides = [1, 1]} : vector<8x32xf32> to vector<8x8xf32>
    %cst_15 = arith.constant dense<0.000000e+00> : vector<8x8xf32>
    %21 = tpu.matmul %18, %19, %cst_15 {dimension_numbers = #tpu.dot_dimension_numbers<[1], [1], [0], [0], [0, 0, 1, 0], [], []>} : vector<8x8xf32>, vector<8x8xf32>, vector<8x8xf32> -> vector<8x8xf32>
    %cst_16 = arith.constant dense<0xFF800000> : vector<8xf32>
    %22 = vector.multi_reduction <maximumf>, %21, %cst_16 [1] : vector<8x8xf32> to vector<8xf32>
    %23 = vector.shape_cast %22 : vector<8xf32> to vector<8x1xf32>
    %24 = vector.broadcast %23 : vector<8x1xf32> to vector<8x8xf32>
    %25 = arith.subf %21, %24 : vector<8x8xf32>
    %26 = math.exp %25 : vector<8x8xf32>
    %cst_17 = arith.constant dense<0.000000e+00> : vector<8xf32>
    %27 = vector.multi_reduction <add>, %26, %cst_17 [1] : vector<8x8xf32> to vector<8xf32>
    %28 = vector.shape_cast %27 : vector<8xf32> to vector<8x1xf32>
    %29 = tpu.reciprocal %28 {approx = true} : vector<8x1xf32> -> vector<8x1xf32>
    %30 = vector.broadcast %29 : vector<8x1xf32> to vector<8x8xf32>
    %31 = arith.mulf %26, %30 : vector<8x8xf32>
    %cst_18 = arith.constant dense<0.000000e+00> : vector<8x8xf32>
    %32 = tpu.matmul %31, %20, %cst_18 {dimension_numbers = #tpu.dot_dimension_numbers<[1], [0], [0], [1], [0, 0, 1, 1], [], []>} : vector<8x8xf32>, vector<8x8xf32>, vector<8x8xf32> -> vector<8x8xf32>
    %33 = vector.extract_strided_slice %11 {offsets = [0, 8], sizes = [8, 8], strides = [1, 1]} : vector<8x32xf32> to vector<8x8xf32>
    %34 = vector.extract_strided_slice %12 {offsets = [0, 8], sizes = [8, 8], strides = [1, 1]} : vector<8x32xf32> to vector<8x8xf32>
    %35 = vector.extract_strided_slice %17 {offsets = [0, 8], sizes = [8, 8], strides = [1, 1]} : vector<8x32xf32> to vector<8x8xf32>
    %cst_19 = arith.constant dense<0.000000e+00> : vector<8x8xf32>
    %36 = tpu.matmul %33, %34, %cst_19 {dimension_numbers = #tpu.dot_dimension_numbers<[1], [1], [0], [0], [0, 0, 1, 0], [], []>} : vector<8x8xf32>, vector<8x8xf32>, vector<8x8xf32> -> vector<8x8xf32>
    %cst_20 = arith.constant dense<0xFF800000> : vector<8xf32>
    %37 = vector.multi_reduction <maximumf>, %36, %cst_20 [1] : vector<8x8xf32> to vector<8xf32>
    %38 = vector.shape_cast %37 : vector<8xf32> to vector<8x1xf32>
    %39 = vector.broadcast %38 : vector<8x1xf32> to vector<8x8xf32>
    %40 = arith.subf %36, %39 : vector<8x8xf32>
    %41 = math.exp %40 : vector<8x8xf32>
    %cst_21 = arith.constant dense<0.000000e+00> : vector<8xf32>
    %42 = vector.multi_reduction <add>, %41, %cst_21 [1] : vector<8x8xf32> to vector<8xf32>
    %43 = vector.shape_cast %42 : vector<8xf32> to vector<8x1xf32>
    %44 = tpu.reciprocal %43 {approx = true} : vector<8x1xf32> -> vector<8x1xf32>
    %45 = vector.broadcast %44 : vector<8x1xf32> to vector<8x8xf32>
    %46 = arith.mulf %41, %45 : vector<8x8xf32>
    %cst_22 = arith.constant dense<0.000000e+00> : vector<8x8xf32>
    %47 = tpu.matmul %46, %35, %cst_22 {dimension_numbers = #tpu.dot_dimension_numbers<[1], [0], [0], [1], [0, 0, 1, 1], [], []>} : vector<8x8xf32>, vector<8x8xf32>, vector<8x8xf32> -> vector<8x8xf32>
    %48 = vector.extract_strided_slice %11 {offsets = [0, 16], sizes = [8, 8], strides = [1, 1]} : vector<8x32xf32> to vector<8x8xf32>
    %49 = vector.extract_strided_slice %12 {offsets = [0, 16], sizes = [8, 8], strides = [1, 1]} : vector<8x32xf32> to vector<8x8xf32>
    %50 = vector.extract_strided_slice %17 {offsets = [0, 16], sizes = [8, 8], strides = [1, 1]} : vector<8x32xf32> to vector<8x8xf32>
    %cst_23 = arith.constant dense<0.000000e+00> : vector<8x8xf32>
    %51 = tpu.matmul %48, %49, %cst_23 {dimension_numbers = #tpu.dot_dimension_numbers<[1], [1], [0], [0], [0, 0, 1, 0], [], []>} : vector<8x8xf32>, vector<8x8xf32>, vector<8x8xf32> -> vector<8x8xf32>
    %cst_24 = arith.constant dense<0xFF800000> : vector<8xf32>
    %52 = vector.multi_reduction <maximumf>, %51, %cst_24 [1] : vector<8x8xf32> to vector<8xf32>
    %53 = vector.shape_cast %52 : vector<8xf32> to vector<8x1xf32>
    %54 = vector.broadcast %53 : vector<8x1xf32> to vector<8x8xf32>
    %55 = arith.subf %51, %54 : vector<8x8xf32>
    %56 = math.exp %55 : vector<8x8xf32>
    %cst_25 = arith.constant dense<0.000000e+00> : vector<8xf32>
    %57 = vector.multi_reduction <add>, %56, %cst_25 [1] : vector<8x8xf32> to vector<8xf32>
    %58 = vector.shape_cast %57 : vector<8xf32> to vector<8x1xf32>
    %59 = tpu.reciprocal %58 {approx = true} : vector<8x1xf32> -> vector<8x1xf32>
    %60 = vector.broadcast %59 : vector<8x1xf32> to vector<8x8xf32>
    %61 = arith.mulf %56, %60 : vector<8x8xf32>
    %cst_26 = arith.constant dense<0.000000e+00> : vector<8x8xf32>
    %62 = tpu.matmul %61, %50, %cst_26 {dimension_numbers = #tpu.dot_dimension_numbers<[1], [0], [0], [1], [0, 0, 1, 1], [], []>} : vector<8x8xf32>, vector<8x8xf32>, vector<8x8xf32> -> vector<8x8xf32>
    %63 = vector.extract_strided_slice %11 {offsets = [0, 24], sizes = [8, 8], strides = [1, 1]} : vector<8x32xf32> to vector<8x8xf32>
    %64 = vector.extract_strided_slice %12 {offsets = [0, 24], sizes = [8, 8], strides = [1, 1]} : vector<8x32xf32> to vector<8x8xf32>
    %65 = vector.extract_strided_slice %17 {offsets = [0, 24], sizes = [8, 8], strides = [1, 1]} : vector<8x32xf32> to vector<8x8xf32>
    %cst_27 = arith.constant dense<0.000000e+00> : vector<8x8xf32>
    %66 = tpu.matmul %63, %64, %cst_27 {dimension_numbers = #tpu.dot_dimension_numbers<[1], [1], [0], [0], [0, 0, 1, 0], [], []>} : vector<8x8xf32>, vector<8x8xf32>, vector<8x8xf32> -> vector<8x8xf32>
    %cst_28 = arith.constant dense<0xFF800000> : vector<8xf32>
    %67 = vector.multi_reduction <maximumf>, %66, %cst_28 [1] : vector<8x8xf32> to vector<8xf32>
    %68 = vector.shape_cast %67 : vector<8xf32> to vector<8x1xf32>
    %69 = vector.broadcast %68 : vector<8x1xf32> to vector<8x8xf32>
    %70 = arith.subf %66, %69 : vector<8x8xf32>
    %71 = math.exp %70 : vector<8x8xf32>
    %cst_29 = arith.constant dense<0.000000e+00> : vector<8xf32>
    %72 = vector.multi_reduction <add>, %71, %cst_29 [1] : vector<8x8xf32> to vector<8xf32>
    %73 = vector.shape_cast %72 : vector<8xf32> to vector<8x1xf32>
    %74 = tpu.reciprocal %73 {approx = true} : vector<8x1xf32> -> vector<8x1xf32>
    %75 = vector.broadcast %74 : vector<8x1xf32> to vector<8x8xf32>
    %76 = arith.mulf %71, %75 : vector<8x8xf32>
    %cst_30 = arith.constant dense<0.000000e+00> : vector<8x8xf32>
    %77 = tpu.matmul %76, %65, %cst_30 {dimension_numbers = #tpu.dot_dimension_numbers<[1], [0], [0], [1], [0, 0, 1, 1], [], []>} : vector<8x8xf32>, vector<8x8xf32>, vector<8x8xf32> -> vector<8x8xf32>
    %78 = tpu.concatenate %32, %47, %62, %77 in 1 : vector<8x8xf32>, vector<8x8xf32>, vector<8x8xf32>, vector<8x8xf32> -> vector<8x32xf32>
    %c0_31 = arith.constant 0 : index
    %c0_32 = arith.constant 0 : index
    %79 = vector.load %arg7[%c0_31, %c0_32] : memref<32x32xf32, #tpu.memory_space<vmem>>, vector<32x32xf32>
    %cst_33 = arith.constant dense<0.000000e+00> : vector<8x32xf32>
    %80 = tpu.matmul %78, %79, %cst_33 {dimension_numbers = #tpu.dot_dimension_numbers<[1], [0], [0], [1], [0, 0, 1, 1], [], []>} : vector<8x32xf32>, vector<32x32xf32>, vector<8x32xf32> -> vector<8x32xf32>
    %c0_34 = arith.constant 0 : index
    %c0_35 = arith.constant 0 : index
    %81 = vector.load %arg8[%c0_34, %c0_35] : memref<1x32xf32, #tpu.memory_space<vmem>>, vector<1x32xf32>
    %82 = vector.broadcast %81 : vector<1x32xf32> to vector<8x32xf32>
    %83 = arith.addf %80, %82 : vector<8x32xf32>
    %84 = arith.addf %3, %83 : vector<8x32xf32>
    %c0_36 = arith.constant 0 : index
    %c0_37 = arith.constant 0 : index
    %85 = vector.load %arg9[%c0_36, %c0_37] : memref<1x32xf32, #tpu.memory_space<vmem>>, vector<1x32xf32>
    %c0_38 = arith.constant 0 : index
    %c0_39 = arith.constant 0 : index
    %86 = vector.load %arg10[%c0_38, %c0_39] : memref<1x32xf32, #tpu.memory_space<vmem>>, vector<1x32xf32>
    %cst_40 = arith.constant dense<0.000000e+00> : vector<8xf32>
    %87 = vector.multi_reduction <add>, %84, %cst_40 [1] : vector<8x32xf32> to vector<8xf32>
    %88 = vector.shape_cast %87 : vector<8xf32> to vector<8x1xf32>
    %cst_41 = arith.constant 3.200000e+01 : f32
    %89 = vector.broadcast %cst_41 : f32 to vector<8x1xf32>
    %90 = arith.divf %88, %89 : vector<8x1xf32>
    %91 = vector.broadcast %90 : vector<8x1xf32> to vector<8x32xf32>
    %92 = arith.subf %84, %91 : vector<8x32xf32>
    %93 = arith.mulf %92, %92 : vector<8x32xf32>
    %cst_42 = arith.constant dense<0.000000e+00> : vector<8xf32>
    %94 = vector.multi_reduction <add>, %93, %cst_42 [1] : vector<8x32xf32> to vector<8xf32>
    %95 = vector.shape_cast %94 : vector<8xf32> to vector<8x1xf32>
    %cst_43 = arith.constant 3.200000e+01 : f32
    %96 = vector.broadcast %cst_43 : f32 to vector<8x1xf32>
    %97 = arith.divf %95, %96 : vector<8x1xf32>
    %cst_44 = arith.constant 9.99999974E-6 : f32
    %98 = vector.broadcast %cst_44 : f32 to vector<8x1xf32>
    %99 = arith.addf %97, %98 : vector<8x1xf32>
    %100 = math.rsqrt %99 : vector<8x1xf32>
    %101 = vector.broadcast %100 : vector<8x1xf32> to vector<8x32xf32>
    %102 = arith.mulf %92, %101 : vector<8x32xf32>
    %103 = vector.broadcast %85 : vector<1x32xf32> to vector<8x32xf32>
    %104 = arith.mulf %102, %103 : vector<8x32xf32>
    %105 = vector.broadcast %86 : vector<1x32xf32> to vector<8x32xf32>
    %106 = arith.addf %104, %105 : vector<8x32xf32>
    %c0_45 = arith.constant 0 : index
    %c0_46 = arith.constant 0 : index
    %c0_47 = arith.constant 0 : index
    %107 = vector.load %arg11[%c0_45, %c0_46, %c0_47] : memref<1x8x32xf32, #tpu.memory_space<vmem>>, vector<1x8x32xf32>
    %108 = vector.shape_cast %107 : vector<1x8x32xf32> to vector<8x32xf32>
    %109 = vector.shape_cast %106 : vector<8x32xf32> to vector<1x8x32xf32>
    tpu.vector_store %arg11[%c0_45, %c0_46, %c0_47], %109 {strides = array<i32>} : memref<1x8x32xf32, #tpu.memory_space<vmem>>, vector<1x8x32xf32>,
    return
  }
  func.func @transform_0(%arg0: i32) -> (i32, i32, i32) {
    %c0_i32 = arith.constant 0 : i32
    %c0_i32_0 = arith.constant 0 : i32
    %c0_i32_1 = arith.constant 0 : i32
    return %arg0, %c0_i32, %c0_i32_0 : i32, i32, i32
  }
  func.func @transform_1(%arg0: i32) -> (i32, i32, i32) {
    %c0_i32 = arith.constant 0 : i32
    %c0_i32_0 = arith.constant 0 : i32
    %c0_i32_1 = arith.constant 0 : i32
    return %arg0, %c0_i32, %c0_i32_0 : i32, i32, i32
  }
  func.func @transform_2(%arg0: i32) -> (i32, i32) {
    %c0_i32 = arith.constant 0 : i32
    %c0_i32_0 = arith.constant 0 : i32
    %c0_i32_1 = arith.constant 0 : i32
    return %c0_i32, %c0_i32_0 : i32, i32
  }
  func.func @transform_3(%arg0: i32) -> (i32, i32) {
    %c0_i32 = arith.constant 0 : i32
    %c0_i32_0 = arith.constant 0 : i32
    %c0_i32_1 = arith.constant 0 : i32
    return %c0_i32, %c0_i32_0 : i32, i32
  }
  func.func @transform_4(%arg0: i32) -> (i32, i32) {
    %c0_i32 = arith.constant 0 : i32
    %c0_i32_0 = arith.constant 0 : i32
    %c0_i32_1 = arith.constant 0 : i32
    return %c0_i32, %c0_i32_0 : i32, i32
  }
  func.func @transform_5(%arg0: i32) -> (i32, i32) {
    %c0_i32 = arith.constant 0 : i32
    %c0_i32_0 = arith.constant 0 : i32
    %c0_i32_1 = arith.constant 0 : i32
    return %c0_i32, %c0_i32_0 : i32, i32
  }
  func.func @transform_6(%arg0: i32) -> (i32, i32) {
    %c0_i32 = arith.constant 0 : i32
    %c0_i32_0 = arith.constant 0 : i32
    %c0_i32_1 = arith.constant 0 : i32
    return %c0_i32, %c0_i32_0 : i32, i32
  }
  func.func @transform_7(%arg0: i32) -> (i32, i32) {
    %c0_i32 = arith.constant 0 : i32
    %c0_i32_0 = arith.constant 0 : i32
    %c0_i32_1 = arith.constant 0 : i32
    return %c0_i32, %c0_i32_0 : i32, i32
  }
  func.func @transform_8(%arg0: i32) -> (i32, i32) {
    %c0_i32 = arith.constant 0 : i32
    %c0_i32_0 = arith.constant 0 : i32
    %c0_i32_1 = arith.constant 0 : i32
    return %c0_i32, %c0_i32_0 : i32, i32
  }
  func.func @transform_9(%arg0: i32) -> (i32, i32) {
    %c0_i32 = arith.constant 0 : i32
    %c0_i32_0 = arith.constant 0 : i32
    %c0_i32_1 = arith.constant 0 : i32
    return %c0_i32, %c0_i32_0 : i32, i32
  }
  func.func @transform_10(%arg0: i32) -> (i32, i32, i32) {
    %c0_i32 = arith.constant 0 : i32
    %c0_i32_0 = arith.constant 0 : i32
    %c0_i32_1 = arith.constant 0 : i32
    return %arg0, %c0_i32, %c0_i32_0 : i32, i32, i32
  }
}

</mosaic_0001>

<llo_original>
// kernel: tpu_custom_call.1
$region0: #{tpu_custom_call.1}
  #allocation0 [shape = 'u32[]', space=smem, size = 0x4, offset = 0x4, fixed_abs, tag = 'smem constant byte address 0x4 - core index']
  #allocation1 [shape = 'u32[144,128]{1,0:T(1,128)}', space=vmem, size = 0x12000, scoped, tag = 'internal scratch']
  %s0 = inlined_call_operand.hbm [shape: f32[2,8,32], index: 0, kind: input, shape index: {}]
  %s1 = inlined_call_operand.hbm [shape: f32[2,8,32], index: 1, kind: input, shape index: {}]
  %s2 = inlined_call_operand.hbm [shape: f32[32,64], index: 2, kind: input, shape index: {}]
  %s3 = inlined_call_operand.vmem [shape: f32[1,64], index: 3, kind: input, shape index: {}]
  %s4 = inlined_call_operand.hbm [shape: f32[32,32], index: 4, kind: input, shape index: {}]
  %s5 = inlined_call_operand.vmem [shape: f32[1,32], index: 5, kind: input, shape index: {}]
  %s6 = inlined_call_operand.hbm [shape: f32[32,32], index: 6, kind: input, shape index: {}]
  %s7 = inlined_call_operand.vmem [shape: f32[1,32], index: 7, kind: input, shape index: {}]
  %s8 = inlined_call_operand.vmem [shape: f32[1,32], index: 8, kind: input, shape index: {}]
  %s9 = inlined_call_operand.vmem [shape: f32[1,32], index: 9, kind: input, shape index: {}]
  %s10 = inlined_call_operand.hbm [shape: f32[2,8,32], index: 10, kind: output, shape index: {}]
  %s11 = sld [smem:[#allocation0]]
  $region93: #{tpu_custom_call.1} parent=0
    _
  %s13 = ssub.s32 1, %s11
  %s14 = scalar_select 0, %s13, %s11
  $region1: #{tpu_custom_call.1} parent=0
    #allocation2 [shape = 'u8[8192]{0}', space=vmem, size = 0x2000, scoped, tag = 'input window, operand 0']
    #allocation3 [shape = 's32[2]{0}', space=sflag, size = 0x8, scoped, tag = 'scoped memory for tpu_custom_call.1']
    #allocation4 [shape = 's32[2]{0}', space=sflag, size = 0x8, scoped, tag = 'scoped memory for tpu_custom_call.1']
    #allocation5 [shape = 'u8[8192]{0}', space=vmem, size = 0x2000, scoped, tag = 'input window, operand 1']
    #allocation6 [shape = 's32[2]{0}', space=sflag, size = 0x8, scoped, tag = 'scoped memory for tpu_custom_call.1']
    #allocation7 [shape = 'u8[16384]{0}', space=vmem, size = 0x4000, scoped, tag = 'input window, operand 2, single buffered']
    #allocation8 [shape = 'u8[16384]{0}', space=vmem, size = 0x4000, scoped, tag = 'input window, operand 4, single buffered']
    #allocation9 [shape = 's32[1]{0}', space=sflag, size = 0x4, scoped, tag = 'scoped memory for tpu_custom_call.1']
    #allocation10 [shape = 'u8[16384]{0}', space=vmem, size = 0x4000, scoped, tag = 'input window, operand 6, single buffered']
    #allocation11 [shape = 'u8[8192]{0}', space=vmem, size = 0x2000, scoped, tag = 'output window, operand 0']
    %15 = vsyncpa [#allocation3], 0
    %s16 = scalar_lea.sflag [#allocation3], 1
    %17 = vsyncpa %s16, 0
    %18 = vsyncpa [#allocation6], 0
    %s19 = scalar_lea.sflag [#allocation6], 1
    %20 = vsyncpa %s19, 0
    %21 = vsyncpa [#allocation9], 0
    %22 = vsyncpa [#allocation4], 0
    %s23 = scalar_lea.sflag [#allocation4], 1
    %24 = vsyncpa %s23, 0
    loop: start=0, step=1, limit=4
    $region2: #{tpu_custom_call.1} parent=1 // loop_pre_header
      _
    $region3: #{tpu_custom_call.1} parent=1 // loop_header
      %s26 = sphi 0, %s30
      %p27 = scmp.ge.s32.totalorder %s26, 4
      %s36 = sphi 0, %s38
      %s39 = sphi 0, %s36
      %s40 = sphi 0, %s39
      %s56 = sphi 0, %s40
      %s62 = sphi 0, %s64
      %s65 = sphi 0, %s62
      %s66 = sphi 0, %s65
      %s82 = sphi 0, %s66
      %s86 = sphi 0, %s86
      %s88 = sphi 0, %s86
      %s89 = sphi 0, %s88
      %s103 = sphi 0, %s89
      %s107 = sphi 0, %s107
      %s109 = sphi 0, %s107
      %s110 = sphi 0, %s109
      %s124 = sphi 0, %s110
      %s128 = sphi 0, %s128
      %s130 = sphi 0, %s128
      %s131 = sphi 0, %s130
      %s145 = sphi 0, %s131
      %s149 = sphi 0, %s149
      %s151 = sphi 0, %s149
      %s152 = sphi 0, %s151
      %s166 = sphi 0, %s152
      %s170 = sphi 0, %s170
      %s172 = sphi 0, %s170
      %s173 = sphi 0, %s172
      %s187 = sphi 0, %s173
      %s191 = sphi 0, %s191
      %s193 = sphi 0, %s191
      %s194 = sphi 0, %s193
      %s208 = sphi 0, %s194
      %s212 = sphi 0, %s212
      %s214 = sphi 0, %s212
      %s215 = sphi 0, %s214
      %s229 = sphi 0, %s215
      %s233 = sphi 0, %s233
      %s235 = sphi 0, %s233
      %s236 = sphi 0, %s235
      %s250 = sphi 0, %s236
      %s256 = sphi 0, %s258
      %s259 = sphi 0, %s256
      %s260 = sphi 0, %s259
      %s276 = sphi 0, %s260
    $region4: #{tpu_custom_call.1} parent=1 // loop_header_branch
      %29 = sbr.rel (%p27) target = $region8
    $region5: #{tpu_custom_call.1} parent=1 // loop_body
      %s31 = ssub.s32 %s26, 1
      %s32 = ssub.s32 %s26, 2
      %s33 = sadd.s32 %s26, 1
      %s34 = ssub.s32 %s26, %s33
      %p35 = scmp.eq.s32.totalorder %s34, 0
      %s37 = sadd.s32 %s36, 1
      %s38 = scalar_select %p35, %s36, %s37
      %p41 = pneg %p35
      %p42 = scmp.eq.s32.totalorder %s26, 1
      %p43 = por %p41, %p42
      %p44 = scmp.ne.s32.totalorder %s36, %s39
      %p45 = scmp.eq.s32.totalorder %s26, 0
      %p46 = por %p44, %p45
      %p47 = scmp.ne.s32.totalorder %s36, %s39
      %p48 = scmp.eq.s32.totalorder %s31, 1
      %p49 = por %p47, %p48
      %p50 = scmp.ne.s32.totalorder %s39, %s40
      %p51 = scmp.eq.s32.totalorder %s31, 0
      %p52 = por %p50, %p51
      %p53 = scmp.ne.s32.totalorder %s39, %s40
      %p54 = scmp.eq.s32.totalorder %s32, 1
      %p55 = por %p53, %p54
      %p57 = scmp.ne.s32.totalorder %s40, %s56
      %p58 = scmp.eq.s32.totalorder %s32, 0
      %p59 = por %p57, %p58
      %s60 = ssub.s32 %s26, %s33
      %p61 = scmp.eq.s32.totalorder %s60, 0
      %s63 = sadd.s32 %s62, 1
      %s64 = scalar_select %p61, %s62, %s63
      %p67 = pneg %p61
      %p68 = scmp.eq.s32.totalorder %s26, 1
      %p69 = por %p67, %p68
      %p70 = scmp.ne.s32.totalorder %s62, %s65
      %p71 = scmp.eq.s32.totalorder %s26, 0
      %p72 = por %p70, %p71
      %p73 = scmp.ne.s32.totalorder %s62, %s65
      %p74 = scmp.eq.s32.totalorder %s31, 1
      %p75 = por %p73, %p74
      %p76 = scmp.ne.s32.totalorder %s65, %s66
      %p77 = scmp.eq.s32.totalorder %s31, 0
      %p78 = por %p76, %p77
      %p79 = scmp.ne.s32.totalorder %s65, %s66
      %p80 = scmp.eq.s32.totalorder %s32, 1
      %p81 = por %p79, %p80
      %p83 = scmp.ne.s32.totalorder %s66, %s82
      %p84 = scmp.eq.s32.totalorder %s32, 0
      %p85 = por %p83, %p84
      %s87 = sadd.s32 %s86, 1
      %p90 = scmp.eq.s32.totalorder %s26, 1
      %p91 = scmp.ne.s32.totalorder %s86, %s88
      %p92 = scmp.eq.s32.totalorder %s26, 0
      %p93 = por %p91, %p92
      %p94 = scmp.ne.s32.totalorder %s86, %s88
      %p95 = scmp.eq.s32.totalorder %s31, 1
      %p96 = por %p94, %p95
      %p97 = scmp.ne.s32.totalorder %s88, %s89
      %p98 = scmp.eq.s32.totalorder %s31, 0
      %p99 = por %p97, %p98
      %p100 = scmp.ne.s32.totalorder %s88, %s89
      %p101 = scmp.eq.s32.totalorder %s32, 1
      %p102 = por %p100, %p101
      %p104 = scmp.ne.s32.totalorder %s89, %s103
      %p105 = scmp.eq.s32.totalorder %s32, 0
      %p106 = por %p104, %p105
      %s108 = sadd.s32 %s107, 1
      %p111 = scmp.eq.s32.totalorder %s26, 1
      %p112 = scmp.ne.s32.totalorder %s107, %s109
      %p113 = scmp.eq.s32.totalorder %s26, 0
      %p114 = por %p112, %p113
      %p115 = scmp.ne.s32.totalorder %s107, %s109
      %p116 = scmp.eq.s32.totalorder %s31, 1
      %p117 = por %p115, %p116
      %p118 = scmp.ne.s32.totalorder %s109, %s110
      %p119 = scmp.eq.s32.totalorder %s31, 0
      %p120 = por %p118, %p119
      %p121 = scmp.ne.s32.totalorder %s109, %s110
      %p122 = scmp.eq.s32.totalorder %s32, 1
      %p123 = por %p121, %p122
      %p125 = scmp.ne.s32.totalorder %s110, %s124
      %p126 = scmp.eq.s32.totalorder %s32, 0
      %p127 = por %p125, %p126
      %s129 = sadd.s32 %s128, 1
      %p132 = scmp.eq.s32.totalorder %s26, 1
      %p133 = scmp.ne.s32.totalorder %s128, %s130
      %p134 = scmp.eq.s32.totalorder %s26, 0
      %p135 = por %p133, %p134
      %p136 = scmp.ne.s32.totalorder %s128, %s130
      %p137 = scmp.eq.s32.totalorder %s31, 1
      %p138 = por %p136, %p137
      %p139 = scmp.ne.s32.totalorder %s130, %s131
      %p140 = scmp.eq.s32.totalorder %s31, 0
      %p141 = por %p139, %p140
      %p142 = scmp.ne.s32.totalorder %s130, %s131
      %p143 = scmp.eq.s32.totalorder %s32, 1
      %p144 = por %p142, %p143
      %p146 = scmp.ne.s32.totalorder %s131, %s145
      %p147 = scmp.eq.s32.totalorder %s32, 0
      %p148 = por %p146, %p147
      %s150 = sadd.s32 %s149, 1
      %p153 = scmp.eq.s32.totalorder %s26, 1
      %p154 = scmp.ne.s32.totalorder %s149, %s151
      %p155 = scmp.eq.s32.totalorder %s26, 0
      %p156 = por %p154, %p155
      %p157 = scmp.ne.s32.totalorder %s149, %s151
      %p158 = scmp.eq.s32.totalorder %s31, 1
      %p159 = por %p157, %p158
      %p160 = scmp.ne.s32.totalorder %s151, %s152
      %p161 = scmp.eq.s32.totalorder %s31, 0
      %p162 = por %p160, %p161
      %p163 = scmp.ne.s32.totalorder %s151, %s152
      %p164 = scmp.eq.s32.totalorder %s32, 1
      %p165 = por %p163, %p164
      %p167 = scmp.ne.s32.totalorder %s152, %s166
      %p168 = scmp.eq.s32.totalorder %s32, 0
      %p169 = por %p167, %p168
      %s171 = sadd.s32 %s170, 1
      %p174 = scmp.eq.s32.totalorder %s26, 1
      %p175 = scmp.ne.s32.totalorder %s170, %s172
      %p176 = scmp.eq.s32.totalorder %s26, 0
      %p177 = por %p175, %p176
      %p178 = scmp.ne.s32.totalorder %s170, %s172
      %p179 = scmp.eq.s32.totalorder %s31, 1
      %p180 = por %p178, %p179
      %p181 = scmp.ne.s32.totalorder %s172, %s173
      %p182 = scmp.eq.s32.totalorder %s31, 0
      %p183 = por %p181, %p182
      %p184 = scmp.ne.s32.totalorder %s172, %s173
      %p185 = scmp.eq.s32.totalorder %s32, 1
      %p186 = por %p184, %p185
      %p188 = scmp.ne.s32.totalorder %s173, %s187
      %p189 = scmp.eq.s32.totalorder %s32, 0
      %p190 = por %p188, %p189
      %s192 = sadd.s32 %s191, 1
      %p195 = scmp.eq.s32.totalorder %s26, 1
      %p196 = scmp.ne.s32.totalorder %s191, %s193
      %p197 = scmp.eq.s32.totalorder %s26, 0
      %p198 = por %p196, %p197
      %p199 = scmp.ne.s32.totalorder %s191, %s193
      %p200 = scmp.eq.s32.totalorder %s31, 1
      %p201 = por %p199, %p200
      %p202 = scmp.ne.s32.totalorder %s193, %s194
      %p203 = scmp.eq.s32.totalorder %s31, 0
      %p204 = por %p202, %p203
      %p205 = scmp.ne.s32.totalorder %s193, %s194
      %p206 = scmp.eq.s32.totalorder %s32, 1
      %p207 = por %p205, %p206
      %p209 = scmp.ne.s32.totalorder %s194, %s208
      %p210 = scmp.eq.s32.totalorder %s32, 0
      %p211 = por %p209, %p210
      %s213 = sadd.s32 %s212, 1
      %p216 = scmp.eq.s32.totalorder %s26, 1
      %p217 = scmp.ne.s32.totalorder %s212, %s214
      %p218 = scmp.eq.s32.totalorder %s26, 0
      %p219 = por %p217, %p218
      %p220 = scmp.ne.s32.totalorder %s212, %s214
      %p221 = scmp.eq.s32.totalorder %s31, 1
      %p222 = por %p220, %p221
      %p223 = scmp.ne.s32.totalorder %s214, %s215
      %p224 = scmp.eq.s32.totalorder %s31, 0
      %p225 = por %p223, %p224
      %p226 = scmp.ne.s32.totalorder %s214, %s215
      %p227 = scmp.eq.s32.totalorder %s32, 1
      %p228 = por %p226, %p227
      %p230 = scmp.ne.s32.totalorder %s215, %s229
      %p231 = scmp.eq.s32.totalorder %s32, 0
      %p232 = por %p230, %p231
      %s234 = sadd.s32 %s233, 1
      %p237 = scmp.eq.s32.totalorder %s26, 1
      %p238 = scmp.ne.s32.totalorder %s233, %s235
      %p239 = scmp.eq.s32.totalorder %s26, 0
      %p240 = por %p238, %p239
      %p241 = scmp.ne.s32.totalorder %s233, %s235
      %p242 = scmp.eq.s32.totalorder %s31, 1
      %p243 = por %p241, %p242
      %p244 = scmp.ne.s32.totalorder %s235, %s236
      %p245 = scmp.eq.s32.totalorder %s31, 0
      %p246 = por %p244, %p245
      %p247 = scmp.ne.s32.totalorder %s235, %s236
      %p248 = scmp.eq.s32.totalorder %s32, 1
      %p249 = por %p247, %p248
      %p251 = scmp.ne.s32.totalorder %s236, %s250
      %p252 = scmp.eq.s32.totalorder %s32, 0
      %p253 = por %p251, %p252
      %s254 = ssub.s32 %s26, %s33
      %p255 = scmp.eq.s32.totalorder %s254, 0
      %s257 = sadd.s32 %s256, 1
      %s258 = scalar_select %p255, %s256, %s257
      %p261 = pneg %p255
      %p262 = scmp.eq.s32.totalorder %s26, 1
      %p263 = por %p261, %p262
      %p264 = scmp.ne.s32.totalorder %s256, %s259
      %p265 = scmp.eq.s32.totalorder %s26, 0
      %p266 = por %p264, %p265
      %p267 = scmp.ne.s32.totalorder %s256, %s259
      %p268 = scmp.eq.s32.totalorder %s31, 1
      %p269 = por %p267, %p268
      %p270 = scmp.ne.s32.totalorder %s259, %s260
      %p271 = scmp.eq.s32.totalorder %s31, 0
      %p272 = por %p270, %p271
      %p273 = scmp.ne.s32.totalorder %s259, %s260
      %p274 = scmp.eq.s32.totalorder %s32, 1
      %p275 = por %p273, %p274
      %p277 = scmp.ne.s32.totalorder %s260, %s276
      %p278 = scmp.eq.s32.totalorder %s32, 0
      %p279 = por %p277, %p278
      %p280 = scmp.le.s32.totalorder 1, %s26
      %p281 = scmp.lt.s32.totalorder %s26, 3
      %p282 = pnand %p280, %p281
      %p283 = pneg %p282
      // Predicated region
      $region9: #{tpu_custom_call.1} parent=5 // pred_check
        _
      $region10: #{tpu_custom_call.1} parent=5 // pred_check_branch
        %285 = sbr.rel (%p282) target = $region12
      $region11: #{tpu_custom_call.1} parent=5 // pred_region
        %s286 = ssub.s32 %s26, 1
        // Predicated region
        $region13: #{tpu_custom_call.1} parent=11 // pred_check
          %p287 = pneg %p99
        $region14: #{tpu_custom_call.1} parent=11 // pred_check_branch
          %289 = sbr.rel (%p287) target = $region16
        $region15: #{tpu_custom_call.1} parent=11 // pred_region
          %s291 = ssub.s32 512, 512
          %292 = vsyncadd [#allocation6], %s291
          %s293 = sshll.u32 [#allocation7], 4
          %s294 = int_to_ptr.vmem [resolvable:$true] %s293
          %299 = dma.hbm_to_vmem [thread:$0]  %s2, 512, %s294, [#allocation6], 128, 128, 8
        $region16: #{tpu_custom_call.1} parent=11 // pred_fallthru
          _
        // Predicated region
        $region17: #{tpu_custom_call.1} parent=11 // pred_check
          %p300 = pneg %p120
        $region18: #{tpu_custom_call.1} parent=11 // pred_check_branch
          %302 = sbr.rel (%p300) target = $region20
        $region19: #{tpu_custom_call.1} parent=11 // pred_region
          _
        $region20: #{tpu_custom_call.1} parent=11 // pred_fallthru
          _
        // Predicated region
        $region21: #{tpu_custom_call.1} parent=11 // pred_check
          %p303 = pneg %p141
        $region22: #{tpu_custom_call.1} parent=11 // pred_check_branch
          %305 = sbr.rel (%p303) target = $region24
        $region23: #{tpu_custom_call.1} parent=11 // pred_region
          %s307 = ssub.s32 512, 512
          %308 = vsyncadd [#allocation9], %s307
          %s309 = sshll.u32 [#allocation8], 4
          %s310 = int_to_ptr.vmem [resolvable:$true] %s309
          %315 = dma.hbm_to_vmem [thread:$0]  %s4, 512, %s310, [#allocation9], 128, 128, 8
        $region24: #{tpu_custom_call.1} parent=11 // pred_fallthru
          _
        // Predicated region
        $region25: #{tpu_custom_call.1} parent=11 // pred_check
          %p316 = pneg %p162
        $region26: #{tpu_custom_call.1} parent=11 // pred_check_branch
          %318 = sbr.rel (%p316) target = $region28
        $region27: #{tpu_custom_call.1} parent=11 // pred_region
          _
        $region28: #{tpu_custom_call.1} parent=11 // pred_fallthru
          _
        // Predicated region
        $region29: #{tpu_custom_call.1} parent=11 // pred_check
          %p319 = pneg %p183
        $region30: #{tpu_custom_call.1} parent=11 // pred_check_branch
          %321 = sbr.rel (%p319) target = $region32
        $region31: #{tpu_custom_call.1} parent=11 // pred_region
          %s323 = ssub.s32 512, 512
          %324 = vsyncadd [#allocation9], %s323
          %s325 = sshll.u32 [#allocation10], 4
          %s326 = int_to_ptr.vmem [resolvable:$true] %s325
          %331 = dma.hbm_to_vmem [thread:$0]  %s6, 512, %s326, [#allocation9], 128, 128, 8
        $region32: #{tpu_custom_call.1} parent=11 // pred_fallthru
          _
        // Predicated region
        $region33: #{tpu_custom_call.1} parent=11 // pred_check
          %p332 = pneg %p204
        $region34: #{tpu_custom_call.1} parent=11 // pred_check_branch
          %334 = sbr.rel (%p332) target = $region36
        $region35: #{tpu_custom_call.1} parent=11 // pred_region
          _
        $region36: #{tpu_custom_call.1} parent=11 // pred_fallthru
          _
        // Predicated region
        $region37: #{tpu_custom_call.1} parent=11 // pred_check
          %p335 = pneg %p225
        $region38: #{tpu_custom_call.1} parent=11 // pred_check_branch
          %337 = sbr.rel (%p335) target = $region40
        $region39: #{tpu_custom_call.1} parent=11 // pred_region
          _
        $region40: #{tpu_custom_call.1} parent=11 // pred_fallthru
          _
        // Predicated region
        $region41: #{tpu_custom_call.1} parent=11 // pred_check
          %p338 = pneg %p246
        $region42: #{tpu_custom_call.1} parent=11 // pred_check_branch
          %340 = sbr.rel (%p338) target = $region44
        $region43: #{tpu_custom_call.1} parent=11 // pred_region
          _
        $region44: #{tpu_custom_call.1} parent=11 // pred_fallthru
          _
      $region12: #{tpu_custom_call.1} parent=5 // pred_fallthru
        _
      %p341 = scmp.lt.s32.totalorder %s26, 2
      // Predicated region
      $region45: #{tpu_custom_call.1} parent=5 // pred_check
        %p342 = pneg %p341
      $region46: #{tpu_custom_call.1} parent=5 // pred_check_branch
        %344 = sbr.rel (%p342) target = $region48
      $region47: #{tpu_custom_call.1} parent=5 // pred_region
        // Predicated region
        $region49: #{tpu_custom_call.1} parent=47 // pred_check
          %p345 = pneg %p46
        $region50: #{tpu_custom_call.1} parent=47 // pred_check_branch
          %347 = sbr.rel (%p345) target = $region52
        $region51: #{tpu_custom_call.1} parent=47 // pred_region
          %s348 = sand.u32 %s36, 1
          %s349 = scalar_lea.sflag [#allocation3], %s348
          %s350 = sand.u32 %s36, 1
          %s351 = smul.addr %s350, 8
          %s352 = scalar_lea.vmem [#allocation2], %s351
          %s354 = ssub.s32 128, 128
          %355 = vsyncadd %s349, %s354
          %s356 = smul.addr %s26, 128
          %s357 = scalar_lea.hbm %s0, %s356
          %s359 = sshll.u32 %s352, 4
          %s360 = int_to_ptr.vmem [resolvable:$true] %s359
          %362 = dma.hbm_to_vmem [thread:$0]  %s357, 128, %s360, %s349
        $region52: #{tpu_custom_call.1} parent=47 // pred_fallthru
          _
        // Predicated region
        $region53: #{tpu_custom_call.1} parent=47 // pred_check
          %p363 = pneg %p72
        $region54: #{tpu_custom_call.1} parent=47 // pred_check_branch
          %365 = sbr.rel (%p363) target = $region56
        $region55: #{tpu_custom_call.1} parent=47 // pred_region
          %s366 = sand.u32 %s26, 1
          %s367 = scalar_lea.sflag [#allocation6], %s366
          %s368 = sand.u32 %s62, 1
          %s369 = smul.addr %s368, 8
          %s370 = scalar_lea.vmem [#allocation5], %s369
          %s372 = ssub.s32 128, 128
          %373 = vsyncadd %s367, %s372
          %s374 = smul.addr %s26, 128
          %s375 = scalar_lea.hbm %s1, %s374
          %s377 = sshll.u32 %s370, 4
          %s378 = int_to_ptr.vmem [resolvable:$true] %s377
          %380 = dma.hbm_to_vmem [thread:$0]  %s375, 128, %s378, %s367
        $region56: #{tpu_custom_call.1} parent=47 // pred_fallthru
          _
      $region48: #{tpu_custom_call.1} parent=5 // pred_fallthru
        _
      %p381 = scmp.le.s32.totalorder 1, %s26
      %p382 = scmp.lt.s32.totalorder %s26, 3
      %p383 = pnand %p381, %p382
      %p384 = pneg %p383
      // Predicated region
      $region57: #{tpu_custom_call.1} parent=5 // pred_check
        _
      $region58: #{tpu_custom_call.1} parent=5 // pred_check_branch
        %386 = sbr.rel (%p383) target = $region60
      $region59: #{tpu_custom_call.1} parent=5 // pred_region
        %s387 = ssub.s32 %s26, 1
        %s388 = sand.u32 %s39, 1
        %s389 = scalar_lea.sflag [#allocation3], %s388
        %s390 = sand.u32 %s39, 1
        %s391 = smul.addr %s390, 8
        %s392 = scalar_lea.vmem [#allocation2], %s391
        // Predicated region
        $region61: #{tpu_custom_call.1} parent=59 // pred_check
          %p393 = pneg %p52
        $region62: #{tpu_custom_call.1} parent=59 // pred_check_branch
          %395 = sbr.rel (%p393) target = $region64
        $region63: #{tpu_custom_call.1} parent=59 // pred_region
          %396 = dma.done %s389, 128
        $region64: #{tpu_custom_call.1} parent=59 // pred_fallthru
          _
        %s397 = sand.u32 %s31, 1
        %s398 = scalar_lea.sflag [#allocation6], %s397
        %s399 = sand.u32 %s65, 1
        %s400 = smul.addr %s399, 8
        %s401 = scalar_lea.vmem [#allocation5], %s400
        // Predicated region
        $region65: #{tpu_custom_call.1} parent=59 // pred_check
          %p402 = pneg %p78
        $region66: #{tpu_custom_call.1} parent=59 // pred_check_branch
          %404 = sbr.rel (%p402) target = $region68
        $region67: #{tpu_custom_call.1} parent=59 // pred_region
          %405 = dma.done %s398, 128
        $region68: #{tpu_custom_call.1} parent=59 // pred_fallthru
          _
        // Predicated region
        $region69: #{tpu_custom_call.1} parent=59 // pred_check
          %p406 = pneg %p99
        $region70: #{tpu_custom_call.1} parent=59 // pred_check_branch
          %408 = sbr.rel (%p406) target = $region72
        $region71: #{tpu_custom_call.1} parent=59 // pred_region
          %409 = dma.done [#allocation6], 512
        $region72: #{tpu_custom_call.1} parent=59 // pred_fallthru
          _
        // Predicated region
        $region73: #{tpu_custom_call.1} parent=59 // pred_check
          %p410 = pneg %p141
        $region74: #{tpu_custom_call.1} parent=59 // pred_check_branch
          %412 = sbr.rel (%p410) target = $region76
        $region75: #{tpu_custom_call.1} parent=59 // pred_region
          %413 = dma.done [#allocation9], 512
        $region76: #{tpu_custom_call.1} parent=59 // pred_fallthru
          _
        // Predicated region
        $region77: #{tpu_custom_call.1} parent=59 // pred_check
          %p414 = pneg %p183
        $region78: #{tpu_custom_call.1} parent=59 // pred_check_branch
          %416 = sbr.rel (%p414) target = $region80
        $region79: #{tpu_custom_call.1} parent=59 // pred_region
          %417 = dma.done [#allocation9], 512
        $region80: #{tpu_custom_call.1} parent=59 // pred_fallthru
          _
        %s418 = sand.u32 %s39, 1
        %s419 = scalar_lea.sflag [#allocation3], %s418
        %s420 = sand.u32 %s39, 1
        %s421 = smul.addr %s420, 8
        %s422 = scalar_lea.vmem [#allocation2], %s421
        %p423 = pneg %p52
        %p424 = pneg %p49
        %s425 = sand.u32 %s31, 1
        %s426 = scalar_lea.sflag [#allocation6], %s425
        %s427 = sand.u32 %s65, 1
        %s428 = smul.addr %s427, 8
        %s429 = scalar_lea.vmem [#allocation5], %s428
        %p430 = pneg %p78
        %p431 = pneg %p75
        %p432 = pneg %p99
        %p433 = pneg %p96
        %p434 = pneg %p120
        %p435 = pneg %p117
        %p436 = pneg %p141
        %p437 = pneg %p138
        %p438 = pneg %p162
        %p439 = pneg %p159
        %p440 = pneg %p183
        %p441 = pneg %p180
        %p442 = pneg %p204
        %p443 = pneg %p201
        %p444 = pneg %p225
        %p445 = pneg %p222
        %p446 = pneg %p246
        %p447 = pneg %p243
        %p448 = pneg %p272
        %p449 = pneg %p269
        %s450 = sand.u32 %s259, 1
        %s451 = scalar_lea.sflag [#allocation4], %s450
        %s452 = sand.u32 %s259, 1
        %s453 = smul.addr %s452, 8
        %s454 = scalar_lea.vmem [#allocation11], %s453
        %v455 = vld [vmem:[%s392] sm:$0xff]
        %v456 = vld [vmem:[%s401] sm:$0xff]
        %v457 = vld [vmem:[#allocation7] sm:$0xff]
        %v458 = vld [vmem:[#allocation7 + $0x8] sm:$0xff]
        %v459 = vld [vmem:[#allocation7 + $0x10] sm:$0xff]
        %v460 = vld [vmem:[#allocation7 + $0x18] sm:$0xff]
        %v461 = vld [vmem:[%s3] sm:$0x1]
        %v463 = vlaneseq
        %v464 = vshrl.u32 %v463, 7
        %v465 = vsub.s32 0, %v464
        %v466 = vrot.slane %v461, %v465
        %vm468 = vcmask 261120
        %v470 = vsel %vm468, %v455, 0
        %472 = vmatprep.subr.mxu0 0.0
        %473 = vmatpush1.msra.mxu0 %v457
        %474 = vmatprep.subr.mxu0 0.0
        %475 = vmatpush1.msra.mxu0 %v458
        %476 = vmatprep.subr.mxu0 0.0
        %477 = vmatpush1.msra.mxu0 %v459
        %478 = vmatprep.subr.mxu0 0.0
        %479 = vmatpush1.msra.mxu0 %v460
        %480 = vmatprep.subr.mxu0 0.0
        %481 = vmatpush1.msra.mxu0 0.0
        %482 = vmatprep.subr.mxu0 0.0
        %483 = vmatpush1.msra.mxu0 0.0
        %484 = vmatprep.subr.mxu0 0.0
        %485 = vmatpush1.msra.mxu0 0.0
        %486 = vmatprep.subr.mxu0 0.0
        %487 = vmatpush1.msra.mxu0 0.0
        %488 = vmatprep.subr.mxu0 0.0
        %489 = vmatpush1.msra.mxu0 0.0
        %490 = vmatprep.subr.mxu0 0.0
        %491 = vmatpush1.msra.mxu0 0.0
        %492 = vmatprep.subr.mxu0 0.0
        %493 = vmatpush1.msra.mxu0 0.0
        %494 = vmatprep.subr.mxu0 0.0
        %495 = vmatpush1.msra.mxu0 0.0
        %496 = vmatprep.subr.mxu0 0.0
        %497 = vmatpush1.msra.mxu0 0.0
        %498 = vmatprep.subr.mxu0 0.0
        %499 = vmatpush1.msra.mxu0 0.0
        %500 = vmatprep.subr.mxu0 0.0
        %501 = vmatpush1.msra.mxu0 0.0
        %502 = vmatprep.subr.mxu0 0.0
        %503 = vmatpush1.msra.mxu0 0.0
        %504 = vmatprep.subr.mxu0 0.0
        %505 = vmatpush1.msra.mxu0 0.0
        %506 = vmatprep.subr.mxu0 0.0
        %507 = vmatpush1.msra.mxu0 0.0
        %508 = vmatprep.subr.mxu0 0.0
        %509 = vmatpush1.msra.mxu0 0.0
        %510 = vmatprep.subr.mxu0 0.0
        %511 = vmatpush1.msra.mxu0 0.0
        %512 = vmatprep.subr.mxu0 0.0
        %513 = vmatpush1.msra.mxu0 0.0
        %514 = vmatprep.subr.mxu0 0.0
        %515 = vmatpush1.msra.mxu0 0.0
        %516 = vmatprep.subr.mxu0 0.0
        %517 = vmatpush1.msra.mxu0 0.0
        %518 = vmatprep.subr.mxu0 0.0
        %519 = vmatpush1.msra.mxu0 0.0
        %520 = vmatprep.subr.mxu0 0.0
        %521 = vmatpush1.msra.mxu0 0.0
        %522 = vmatprep.subr.mxu0 0.0
        %523 = vmatpush1.msra.mxu0 0.0
        %524 = vmatprep.subr.mxu0 0.0
        %525 = vmatpush1.msra.mxu0 0.0
        %526 = vmatprep.subr.mxu0 0.0
        %527 = vmatpush1.msra.mxu0 0.0
        %528 = vmatprep.subr.mxu0 0.0
        %529 = vmatpush1.msra.mxu0 0.0
        %530 = vmatprep.subr.mxu0 0.0
        %531 = vmatpush1.msra.mxu0 0.0
        %532 = vmatprep.subr.mxu0 0.0
        %533 = vmatpush1.msra.mxu0 0.0
        %534 = vmatprep.subr.mxu0 0.0
        %535 = vmatpush1.msra.mxu0 0.0
        %536 = vmatprep.mubr.f32.mxu0 0.0
        %537 = vmatmul.mubr.f32.gmra.mrb[0].mxu0 %v470
        %v538 = vpop.f32.mrb[0].mxu0
        %v539 = vadd.f32 %v466, %v538
        %v540 = vpop.f32.mrb[0].mxu0
        %541 = vdwg.mxu0
        %v542 = vmul.f32 %v539, 0.35355338
        %v543 = vld [vmem:[#allocation8] sm:$0xff]
        %v544 = vld [vmem:[#allocation8 + $0x8] sm:$0xff]
        %v545 = vld [vmem:[#allocation8 + $0x10] sm:$0xff]
        %v546 = vld [vmem:[#allocation8 + $0x18] sm:$0xff]
        %v547 = vld [vmem:[%s5] sm:$0x1]
        %v549 = vlaneseq
        %v550 = vshrl.u32 %v549, 7
        %v551 = vsub.s32 0, %v550
        %v552 = vrot.slane %v547, %v551
        %v555 = vsel %vm468, %v456, 0
        %557 = vmatprep.subr.mxu0 0.0
        %558 = vmatpush1.msra.mxu0 %v543
        %559 = vmatprep.subr.mxu0 0.0
        %560 = vmatpush1.msra.mxu0 %v544
        %561 = vmatprep.subr.mxu0 0.0
        %562 = vmatpush1.msra.mxu0 %v545
        %563 = vmatprep.subr.mxu0 0.0
        %564 = vmatpush1.msra.mxu0 %v546
        %565 = vmatprep.subr.mxu0 0.0
        %566 = vmatpush1.msra.mxu0 0.0
        %567 = vmatprep.subr.mxu0 0.0
        %568 = vmatpush1.msra.mxu0 0.0
        %569 = vmatprep.subr.mxu0 0.0
        %570 = vmatpush1.msra.mxu0 0.0
        %571 = vmatprep.subr.mxu0 0.0
        %572 = vmatpush1.msra.mxu0 0.0
        %573 = vmatprep.subr.mxu0 0.0
        %574 = vmatpush1.msra.mxu0 0.0
        %575 = vmatprep.subr.mxu0 0.0
        %576 = vmatpush1.msra.mxu0 0.0
        %577 = vmatprep.subr.mxu0 0.0
        %578 = vmatpush1.msra.mxu0 0.0
        %579 = vmatprep.subr.mxu0 0.0
        %580 = vmatpush1.msra.mxu0 0.0
        %581 = vmatprep.subr.mxu0 0.0
        %582 = vmatpush1.msra.mxu0 0.0
        %583 = vmatprep.subr.mxu0 0.0
        %584 = vmatpush1.msra.mxu0 0.0
        %585 = vmatprep.subr.mxu0 0.0
        %586 = vmatpush1.msra.mxu0 0.0
        %587 = vmatprep.subr.mxu0 0.0
        %588 = vmatpush1.msra.mxu0 0.0
        %589 = vmatprep.subr.mxu0 0.0
        %590 = vmatpush1.msra.mxu0 0.0
        %591 = vmatprep.subr.mxu0 0.0
        %592 = vmatpush1.msra.mxu0 0.0
        %593 = vmatprep.subr.mxu0 0.0
        %594 = vmatpush1.msra.mxu0 0.0
        %595 = vmatprep.subr.mxu0 0.0
        %596 = vmatpush1.msra.mxu0 0.0
        %597 = vmatprep.subr.mxu0 0.0
        %598 = vmatpush1.msra.mxu0 0.0
        %599 = vmatprep.subr.mxu0 0.0
        %600 = vmatpush1.msra.mxu0 0.0
        %601 = vmatprep.subr.mxu0 0.0
        %602 = vmatpush1.msra.mxu0 0.0
        %603 = vmatprep.subr.mxu0 0.0
        %604 = vmatpush1.msra.mxu0 0.0
        %605 = vmatprep.subr.mxu0 0.0
        %606 = vmatpush1.msra.mxu0 0.0
        %607 = vmatprep.subr.mxu0 0.0
        %608 = vmatpush1.msra.mxu0 0.0
        %609 = vmatprep.subr.mxu0 0.0
        %610 = vmatpush1.msra.mxu0 0.0
        %611 = vmatprep.subr.mxu0 0.0
        %612 = vmatpush1.msra.mxu0 0.0
        %613 = vmatprep.subr.mxu0 0.0
        %614 = vmatpush1.msra.mxu0 0.0
        %615 = vmatprep.subr.mxu0 0.0
        %616 = vmatpush1.msra.mxu0 0.0
        %617 = vmatprep.subr.mxu0 0.0
        %618 = vmatpush1.msra.mxu0 0.0
        %619 = vmatprep.subr.mxu0 0.0
        %620 = vmatpush1.msra.mxu0 0.0
        %621 = vmatprep.mubr.f32.mxu0 0.0
        %622 = vmatmul.mubr.f32.gmra.mrb[0].mxu0 %v555
        %v623 = vpop.f32.mrb[0].mxu0
        %v624 = vadd.f32 %v552, %v623
        %v625 = vpop.f32.mrb[0].mxu0
        %626 = vdwg.mxu0
        %628 = vrot.lane.b32.xlu0 %v539, 96
        %v629 = vpop.permute.xlu0 %628
        %vm630 = vcmask 64512
        %v632 = vsel %vm630, %v542, 0
        %v634 = vsel %vm630, %v629, 0
        %636 = vmatprep.subr.mxu0 0.0
        %637 = vmatpush1.xpose.msra.mxu0 %v634
        %638 = vmatprep.subr.mxu0 0.0
        %639 = vmatpush1.xpose.msra.mxu0 0.0
        %640 = vmatprep.subr.mxu0 0.0
        %641 = vmatpush1.xpose.msra.mxu0 0.0
        %642 = vmatprep.subr.mxu0 0.0
        %643 = vmatpush1.xpose.msra.mxu0 0.0
        %644 = vmatprep.subr.mxu0 0.0
        %645 = vmatpush1.xpose.msra.mxu0 0.0
        %646 = vmatprep.subr.mxu0 0.0
        %647 = vmatpush1.xpose.msra.mxu0 0.0
        %648 = vmatprep.subr.mxu0 0.0
        %649 = vmatpush1.xpose.msra.mxu0 0.0
        %650 = vmatprep.subr.mxu0 0.0
        %651 = vmatpush1.xpose.msra.mxu0 0.0
        %652 = vmatprep.subr.mxu0 0.0
        %653 = vmatpush1.xpose.msra.mxu0 0.0
        %654 = vmatprep.subr.mxu0 0.0
        %655 = vmatpush1.xpose.msra.mxu0 0.0
        %656 = vmatprep.subr.mxu0 0.0
        %657 = vmatpush1.xpose.msra.mxu0 0.0
        %658 = vmatprep.subr.mxu0 0.0
        %659 = vmatpush1.xpose.msra.mxu0 0.0
        %660 = vmatprep.subr.mxu0 0.0
        %661 = vmatpush1.xpose.msra.mxu0 0.0
        %662 = vmatprep.subr.mxu0 0.0
        %663 = vmatpush1.xpose.msra.mxu0 0.0
        %664 = vmatprep.subr.mxu0 0.0
        %665 = vmatpush1.xpose.msra.mxu0 0.0
        %666 = vmatprep.subr.mxu0 0.0
        %667 = vmatpush1.xpose.msra.mxu0 0.0
        %668 = vmatprep.subr.mxu0 0.0
        %669 = vmatpush1.xpose.msra.mxu0 0.0
        %670 = vmatprep.subr.mxu0 0.0
        %671 = vmatpush1.xpose.msra.mxu0 0.0
        %672 = vmatprep.subr.mxu0 0.0
        %673 = vmatpush1.xpose.msra.mxu0 0.0
        %674 = vmatprep.subr.mxu0 0.0
        %675 = vmatpush1.xpose.msra.mxu0 0.0
        %676 = vmatprep.subr.mxu0 0.0
        %677 = vmatpush1.xpose.msra.mxu0 0.0
        %678 = vmatprep.subr.mxu0 0.0
        %679 = vmatpush1.xpose.msra.mxu0 0.0
        %680 = vmatprep.subr.mxu0 0.0
        %681 = vmatpush1.xpose.msra.mxu0 0.0
        %682 = vmatprep.subr.mxu0 0.0
        %683 = vmatpush1.xpose.msra.mxu0 0.0
        %684 = vmatprep.subr.mxu0 0.0
        %685 = vmatpush1.xpose.msra.mxu0 0.0
        %686 = vmatprep.subr.mxu0 0.0
        %687 = vmatpush1.xpose.msra.mxu0 0.0
        %688 = vmatprep.subr.mxu0 0.0
        %689 = vmatpush1.xpose.msra.mxu0 0.0
        %690 = vmatprep.subr.mxu0 0.0
        %691 = vmatpush1.xpose.msra.mxu0 0.0
        %692 = vmatprep.subr.mxu0 0.0
        %693 = vmatpush1.xpose.msra.mxu0 0.0
        %694 = vmatprep.subr.mxu0 0.0
        %695 = vmatpush1.xpose.msra.mxu0 0.0
        %696 = vmatprep.subr.mxu0 0.0
        %697 = vmatpush1.xpose.msra.mxu0 0.0
        %698 = vmatprep.subr.mxu0 0.0
        %699 = vmatpush1.xpose.msra.mxu0 0.0
        %700 = vmatprep.mubr.f32.mxu0 0.0
        %701 = vmatmul.mubr.f32.gmra.mrb[0].mxu0 %v632
        %v702 = vpop.f32.mrb[0].mxu0
        %v703 = vadd.f32 0.0, %v702
        %v704 = vpop.f32.mrb[0].mxu0
        %705 = vdwg.mxu0
        %v706 = vsel %vm630, %v703, -inf
        %707 = vmax.xlane.f32.xlu0 %v706
        %v708 = vpop.xlane.xlu0 %707
        %v709 = vsub.f32 %v703, %v708
        %v710 = vmul.f32 %v709, 1.442695
        %v711 = vpow.pop %v710
        %v712 = vsel %vm630, %v711, 0.0
        %713 = vadd.xlane.f32.xlu0 %v712
        %v714 = vpop.xlane.xlu0 %713
        %v715 = vrcp.pop %v714
        %v716 = vmul.f32 %v711, %v715
        %v718 = vsel %vm630, %v716, 0
        %720 = vmatprep.subr.mxu0 0.0
        %721 = vmatpush1.msra.mxu0 %v624
        %722 = vmatprep.subr.mxu0 0.0
        %723 = vmatpush1.msra.mxu0 0.0
        %724 = vmatprep.subr.mxu0 0.0
        %725 = vmatpush1.msra.mxu0 0.0
        %726 = vmatprep.subr.mxu0 0.0
        %727 = vmatpush1.msra.mxu0 0.0
        %728 = vmatprep.subr.mxu0 0.0
        %729 = vmatpush1.msra.mxu0 0.0
        %730 = vmatprep.subr.mxu0 0.0
        %731 = vmatpush1.msra.mxu0 0.0
        %732 = vmatprep.subr.mxu0 0.0
        %733 = vmatpush1.msra.mxu0 0.0
        %734 = vmatprep.subr.mxu0 0.0
        %735 = vmatpush1.msra.mxu0 0.0
        %736 = vmatprep.subr.mxu0 0.0
        %737 = vmatpush1.msra.mxu0 0.0
        %738 = vmatprep.subr.mxu0 0.0
        %739 = vmatpush1.msra.mxu0 0.0
        %740 = vmatprep.subr.mxu0 0.0
        %741 = vmatpush1.msra.mxu0 0.0
        %742 = vmatprep.subr.mxu0 0.0
        %743 = vmatpush1.msra.mxu0 0.0
        %744 = vmatprep.subr.mxu0 0.0
        %745 = vmatpush1.msra.mxu0 0.0
        %746 = vmatprep.subr.mxu0 0.0
        %747 = vmatpush1.msra.mxu0 0.0
        %748 = vmatprep.subr.mxu0 0.0
        %749 = vmatpush1.msra.mxu0 0.0
        %750 = vmatprep.subr.mxu0 0.0
        %751 = vmatpush1.msra.mxu0 0.0
        %752 = vmatprep.subr.mxu0 0.0
        %753 = vmatpush1.msra.mxu0 0.0
        %754 = vmatprep.subr.mxu0 0.0
        %755 = vmatpush1.msra.mxu0 0.0
        %756 = vmatprep.subr.mxu0 0.0
        %757 = vmatpush1.msra.mxu0 0.0
        %758 = vmatprep.subr.mxu0 0.0
        %759 = vmatpush1.msra.mxu0 0.0
        %760 = vmatprep.subr.mxu0 0.0
        %761 = vmatpush1.msra.mxu0 0.0
        %762 = vmatprep.subr.mxu0 0.0
        %763 = vmatpush1.msra.mxu0 0.0
        %764 = vmatprep.subr.mxu0 0.0
        %765 = vmatpush1.msra.mxu0 0.0
        %766 = vmatprep.subr.mxu0 0.0
        %767 = vmatpush1.msra.mxu0 0.0
        %768 = vmatprep.subr.mxu0 0.0
        %769 = vmatpush1.msra.mxu0 0.0
        %770 = vmatprep.subr.mxu0 0.0
        %771 = vmatpush1.msra.mxu0 0.0
        %772 = vmatprep.subr.mxu0 0.0
        %773 = vmatpush1.msra.mxu0 0.0
        %774 = vmatprep.subr.mxu0 0.0
        %775 = vmatpush1.msra.mxu0 0.0
        %776 = vmatprep.subr.mxu0 0.0
        %777 = vmatpush1.msra.mxu0 0.0
        %778 = vmatprep.subr.mxu0 0.0
        %779 = vmatpush1.msra.mxu0 0.0
        %780 = vmatprep.subr.mxu0 0.0
        %781 = vmatpush1.msra.mxu0 0.0
        %782 = vmatprep.subr.mxu0 0.0
        %783 = vmatpush1.msra.mxu0 0.0
        %784 = vmatprep.mubr.f32.mxu0 0.0
        %785 = vmatmul.mubr.f32.gmra.mrb[0].mxu0 %v718
        %v786 = vpop.f32.mrb[0].mxu0
        %v787 = vadd.f32 0.0, %v786
        %v788 = vpop.f32.mrb[0].mxu0
        %789 = vdwg.mxu0
        %790 = vrot.lane.b32.xlu0 %v542, 120
        %v791 = vpop.permute.xlu0 %790
        %792 = vrot.lane.b32.xlu0 %v539, 88
        %v793 = vpop.permute.xlu0 %792
        %v794 = vsel %vm630, %v791, 0
        %v796 = vsel %vm630, %v793, 0
        %798 = vmatprep.subr.mxu0 0.0
        %799 = vmatpush1.xpose.msra.mxu0 %v796
        %800 = vmatprep.subr.mxu0 0.0
        %801 = vmatpush1.xpose.msra.mxu0 0.0
        %802 = vmatprep.subr.mxu0 0.0
        %803 = vmatpush1.xpose.msra.mxu0 0.0
        %804 = vmatprep.subr.mxu0 0.0
        %805 = vmatpush1.xpose.msra.mxu0 0.0
        %806 = vmatprep.subr.mxu0 0.0
        %807 = vmatpush1.xpose.msra.mxu0 0.0
        %808 = vmatprep.subr.mxu0 0.0
        %809 = vmatpush1.xpose.msra.mxu0 0.0
        %810 = vmatprep.subr.mxu0 0.0
        %811 = vmatpush1.xpose.msra.mxu0 0.0
        %812 = vmatprep.subr.mxu0 0.0
        %813 = vmatpush1.xpose.msra.mxu0 0.0
        %814 = vmatprep.subr.mxu0 0.0
        %815 = vmatpush1.xpose.msra.mxu0 0.0
        %816 = vmatprep.subr.mxu0 0.0
        %817 = vmatpush1.xpose.msra.mxu0 0.0
        %818 = vmatprep.subr.mxu0 0.0
        %819 = vmatpush1.xpose.msra.mxu0 0.0
        %820 = vmatprep.subr.mxu0 0.0
        %821 = vmatpush1.xpose.msra.mxu0 0.0
        %822 = vmatprep.subr.mxu0 0.0
        %823 = vmatpush1.xpose.msra.mxu0 0.0
        %824 = vmatprep.subr.mxu0 0.0
        %825 = vmatpush1.xpose.msra.mxu0 0.0
        %826 = vmatprep.subr.mxu0 0.0
        %827 = vmatpush1.xpose.msra.mxu0 0.0
        %828 = vmatprep.subr.mxu0 0.0
        %829 = vmatpush1.xpose.msra.mxu0 0.0
        %830 = vmatprep.subr.mxu0 0.0
        %831 = vmatpush1.xpose.msra.mxu0 0.0
        %832 = vmatprep.subr.mxu0 0.0
        %833 = vmatpush1.xpose.msra.mxu0 0.0
        %834 = vmatprep.subr.mxu0 0.0
        %835 = vmatpush1.xpose.msra.mxu0 0.0
        %836 = vmatprep.subr.mxu0 0.0
        %837 = vmatpush1.xpose.msra.mxu0 0.0
        %838 = vmatprep.subr.mxu0 0.0
        %839 = vmatpush1.xpose.msra.mxu0 0.0
        %840 = vmatprep.subr.mxu0 0.0
        %841 = vmatpush1.xpose.msra.mxu0 0.0
        %842 = vmatprep.subr.mxu0 0.0
        %843 = vmatpush1.xpose.msra.mxu0 0.0
        %844 = vmatprep.subr.mxu0 0.0
        %845 = vmatpush1.xpose.msra.mxu0 0.0
        %846 = vmatprep.subr.mxu0 0.0
        %847 = vmatpush1.xpose.msra.mxu0 0.0
        %848 = vmatprep.subr.mxu0 0.0
        %849 = vmatpush1.xpose.msra.mxu0 0.0
        %850 = vmatprep.subr.mxu0 0.0
        %851 = vmatpush1.xpose.msra.mxu0 0.0
        %852 = vmatprep.subr.mxu0 0.0
        %853 = vmatpush1.xpose.msra.mxu0 0.0
        %854 = vmatprep.subr.mxu0 0.0
        %855 = vmatpush1.xpose.msra.mxu0 0.0
        %856 = vmatprep.subr.mxu0 0.0
        %857 = vmatpush1.xpose.msra.mxu0 0.0
        %858 = vmatprep.subr.mxu0 0.0
        %859 = vmatpush1.xpose.msra.mxu0 0.0
        %860 = vmatprep.subr.mxu0 0.0
        %861 = vmatpush1.xpose.msra.mxu0 0.0
        %862 = vmatprep.mubr.f32.mxu0 0.0
        %863 = vmatmul.mubr.f32.gmra.mrb[0].mxu0 %v794
        %v864 = vpop.f32.mrb[0].mxu0
        %v865 = vadd.f32 0.0, %v864
        %v866 = vpop.f32.mrb[0].mxu0
        %867 = vdwg.mxu0
        %v868 = vsel %vm630, %v865, -inf
        %869 = vmax.xlane.f32.xlu0 %v868
        %v870 = vpop.xlane.xlu0 %869
        %v871 = vsub.f32 %v865, %v870
        %v872 = vmul.f32 %v871, 1.442695
        %v873 = vpow.pop %v872
        %v874 = vsel %vm630, %v873, 0.0
        %875 = vadd.xlane.f32.xlu0 %v874
        %v876 = vpop.xlane.xlu0 %875
        %v877 = vrcp.pop %v876
        %v878 = vmul.f32 %v873, %v877
        %880 = vrot.lane.b32.xlu0 %v624, 120
        %v881 = vpop.permute.xlu0 %880
        %v884 = vsel %vm630, %v878, 0
        %886 = vmatprep.subr.mxu0 0.0
        %887 = vmatpush1.msra.mxu0 %v881
        %888 = vmatprep.subr.mxu0 0.0
        %889 = vmatpush1.msra.mxu0 0.0
        %890 = vmatprep.subr.mxu0 0.0
        %891 = vmatpush1.msra.mxu0 0.0
        %892 = vmatprep.subr.mxu0 0.0
        %893 = vmatpush1.msra.mxu0 0.0
        %894 = vmatprep.subr.mxu0 0.0
        %895 = vmatpush1.msra.mxu0 0.0
        %896 = vmatprep.subr.mxu0 0.0
        %897 = vmatpush1.msra.mxu0 0.0
        %898 = vmatprep.subr.mxu0 0.0
        %899 = vmatpush1.msra.mxu0 0.0
        %900 = vmatprep.subr.mxu0 0.0
        %901 = vmatpush1.msra.mxu0 0.0
        %902 = vmatprep.subr.mxu0 0.0
        %903 = vmatpush1.msra.mxu0 0.0
        %904 = vmatprep.subr.mxu0 0.0
        %905 = vmatpush1.msra.mxu0 0.0
        %906 = vmatprep.subr.mxu0 0.0
        %907 = vmatpush1.msra.mxu0 0.0
        %908 = vmatprep.subr.mxu0 0.0
        %909 = vmatpush1.msra.mxu0 0.0
        %910 = vmatprep.subr.mxu0 0.0
        %911 = vmatpush1.msra.mxu0 0.0
        %912 = vmatprep.subr.mxu0 0.0
        %913 = vmatpush1.msra.mxu0 0.0
        %914 = vmatprep.subr.mxu0 0.0
        %915 = vmatpush1.msra.mxu0 0.0
        %916 = vmatprep.subr.mxu0 0.0
        %917 = vmatpush1.msra.mxu0 0.0
        %918 = vmatprep.subr.mxu0 0.0
        %919 = vmatpush1.msra.mxu0 0.0
        %920 = vmatprep.subr.mxu0 0.0
        %921 = vmatpush1.msra.mxu0 0.0
        %922 = vmatprep.subr.mxu0 0.0
        %923 = vmatpush1.msra.mxu0 0.0
        %924 = vmatprep.subr.mxu0 0.0
        %925 = vmatpush1.msra.mxu0 0.0
        %926 = vmatprep.subr.mxu0 0.0
        %927 = vmatpush1.msra.mxu0 0.0
        %928 = vmatprep.subr.mxu0 0.0
        %929 = vmatpush1.msra.mxu0 0.0
        %930 = vmatprep.subr.mxu0 0.0
        %931 = vmatpush1.msra.mxu0 0.0
        %932 = vmatprep.subr.mxu0 0.0
        %933 = vmatpush1.msra.mxu0 0.0
        %934 = vmatprep.subr.mxu0 0.0
        %935 = vmatpush1.msra.mxu0 0.0
        %936 = vmatprep.subr.mxu0 0.0
        %937 = vmatpush1.msra.mxu0 0.0
        %938 = vmatprep.subr.mxu0 0.0
        %939 = vmatpush1.msra.mxu0 0.0
        %940 = vmatprep.subr.mxu0 0.0
        %941 = vmatpush1.msra.mxu0 0.0
        %942 = vmatprep.subr.mxu0 0.0
        %943 = vmatpush1.msra.mxu0 0.0
        %944 = vmatprep.subr.mxu0 0.0
        %945 = vmatpush1.msra.mxu0 0.0
        %946 = vmatprep.subr.mxu0 0.0
        %947 = vmatpush1.msra.mxu0 0.0
        %948 = vmatprep.subr.mxu0 0.0
        %949 = vmatpush1.msra.mxu0 0.0
        %950 = vmatprep.mubr.f32.mxu0 0.0
        %951 = vmatmul.mubr.f32.gmra.mrb[0].mxu0 %v884
        %v952 = vpop.f32.mrb[0].mxu0
        %v953 = vadd.f32 0.0, %v952
        %v954 = vpop.f32.mrb[0].mxu0
        %955 = vdwg.mxu0
        %956 = vrot.lane.b32.xlu0 %v542, 112
        %v957 = vpop.permute.xlu0 %956
        %958 = vrot.lane.b32.xlu0 %v539, 80
        %v959 = vpop.permute.xlu0 %958
        %v960 = vsel %vm630, %v957, 0
        %v962 = vsel %vm630, %v959, 0
        %964 = vmatprep.subr.mxu0 0.0
        %965 = vmatpush1.xpose.msra.mxu0 %v962
        %966 = vmatprep.subr.mxu0 0.0
        %967 = vmatpush1.xpose.msra.mxu0 0.0
        %968 = vmatprep.subr.mxu0 0.0
        %969 = vmatpush1.xpose.msra.mxu0 0.0
        %970 = vmatprep.subr.mxu0 0.0
        %971 = vmatpush1.xpose.msra.mxu0 0.0
        %972 = vmatprep.subr.mxu0 0.0
        %973 = vmatpush1.xpose.msra.mxu0 0.0
        %974 = vmatprep.subr.mxu0 0.0
        %975 = vmatpush1.xpose.msra.mxu0 0.0
        %976 = vmatprep.subr.mxu0 0.0
        %977 = vmatpush1.xpose.msra.mxu0 0.0
        %978 = vmatprep.subr.mxu0 0.0
        %979 = vmatpush1.xpose.msra.mxu0 0.0
        %980 = vmatprep.subr.mxu0 0.0
        %981 = vmatpush1.xpose.msra.mxu0 0.0
        %982 = vmatprep.subr.mxu0 0.0
        %983 = vmatpush1.xpose.msra.mxu0 0.0
        %984 = vmatprep.subr.mxu0 0.0
        %985 = vmatpush1.xpose.msra.mxu0 0.0
        %986 = vmatprep.subr.mxu0 0.0
        %987 = vmatpush1.xpose.msra.mxu0 0.0
        %988 = vmatprep.subr.mxu0 0.0
        %989 = vmatpush1.xpose.msra.mxu0 0.0
        %990 = vmatprep.subr.mxu0 0.0
        %991 = vmatpush1.xpose.msra.mxu0 0.0
        %992 = vmatprep.subr.mxu0 0.0
        %993 = vmatpush1.xpose.msra.mxu0 0.0
        %994 = vmatprep.subr.mxu0 0.0
        %995 = vmatpush1.xpose.msra.mxu0 0.0
        %996 = vmatprep.subr.mxu0 0.0
        %997 = vmatpush1.xpose.msra.mxu0 0.0
        %998 = vmatprep.subr.mxu0 0.0
        %999 = vmatpush1.xpose.msra.mxu0 0.0
        %1000 = vmatprep.subr.mxu0 0.0
        %1001 = vmatpush1.xpose.msra.mxu0 0.0
        %1002 = vmatprep.subr.mxu0 0.0
        %1003 = vmatpush1.xpose.msra.mxu0 0.0
        %1004 = vmatprep.subr.mxu0 0.0
        %1005 = vmatpush1.xpose.msra.mxu0 0.0
        %1006 = vmatprep.subr.mxu0 0.0
        %1007 = vmatpush1.xpose.msra.mxu0 0.0
        %1008 = vmatprep.subr.mxu0 0.0
        %1009 = vmatpush1.xpose.msra.mxu0 0.0
        %1010 = vmatprep.subr.mxu0 0.0
        %1011 = vmatpush1.xpose.msra.mxu0 0.0
        %1012 = vmatprep.subr.mxu0 0.0
        %1013 = vmatpush1.xpose.msra.mxu0 0.0
        %1014 = vmatprep.subr.mxu0 0.0
        %1015 = vmatpush1.xpose.msra.mxu0 0.0
        %1016 = vmatprep.subr.mxu0 0.0
        %1017 = vmatpush1.xpose.msra.mxu0 0.0
        %1018 = vmatprep.subr.mxu0 0.0
        %1019 = vmatpush1.xpose.msra.mxu0 0.0
        %1020 = vmatprep.subr.mxu0 0.0
        %1021 = vmatpush1.xpose.msra.mxu0 0.0
        %1022 = vmatprep.subr.mxu0 0.0
        %1023 = vmatpush1.xpose.msra.mxu0 0.0
        %1024 = vmatprep.subr.mxu0 0.0
        %1025 = vmatpush1.xpose.msra.mxu0 0.0
        %1026 = vmatprep.subr.mxu0 0.0
        %1027 = vmatpush1.xpose.msra.mxu0 0.0
        %1028 = vmatprep.mubr.f32.mxu0 0.0
        %1029 = vmatmul.mubr.f32.gmra.mrb[0].mxu0 %v960
        %v1030 = vpop.f32.mrb[0].mxu0
        %v1031 = vadd.f32 0.0, %v1030
        %v1032 = vpop.f32.mrb[0].mxu0
        %1033 = vdwg.mxu0
        %v1034 = vsel %vm630, %v1031, -inf
        %1035 = vmax.xlane.f32.xlu0 %v1034
        %v1036 = vpop.xlane.xlu0 %1035
        %v1037 = vsub.f32 %v1031, %v1036
        %v1038 = vmul.f32 %v1037, 1.442695
        %v1039 = vpow.pop %v1038
        %v1040 = vsel %vm630, %v1039, 0.0
        %1041 = vadd.xlane.f32.xlu0 %v1040
        %v1042 = vpop.xlane.xlu0 %1041
        %v1043 = vrcp.pop %v1042
        %v1044 = vmul.f32 %v1039, %v1043
        %1045 = vrot.lane.b32.xlu0 %v624, 112
        %v1046 = vpop.permute.xlu0 %1045
        %v1049 = vsel %vm630, %v1044, 0
        %1051 = vmatprep.subr.mxu0 0.0
        %1052 = vmatpush1.msra.mxu0 %v1046
        %1053 = vmatprep.subr.mxu0 0.0
        %1054 = vmatpush1.msra.mxu0 0.0
        %1055 = vmatprep.subr.mxu0 0.0
        %1056 = vmatpush1.msra.mxu0 0.0
        %1057 = vmatprep.subr.mxu0 0.0
        %1058 = vmatpush1.msra.mxu0 0.0
        %1059 = vmatprep.subr.mxu0 0.0
        %1060 = vmatpush1.msra.mxu0 0.0
        %1061 = vmatprep.subr.mxu0 0.0
        %1062 = vmatpush1.msra.mxu0 0.0
        %1063 = vmatprep.subr.mxu0 0.0
        %1064 = vmatpush1.msra.mxu0 0.0
        %1065 = vmatprep.subr.mxu0 0.0
        %1066 = vmatpush1.msra.mxu0 0.0
        %1067 = vmatprep.subr.mxu0 0.0
        %1068 = vmatpush1.msra.mxu0 0.0
        %1069 = vmatprep.subr.mxu0 0.0
        %1070 = vmatpush1.msra.mxu0 0.0
        %1071 = vmatprep.subr.mxu0 0.0
        %1072 = vmatpush1.msra.mxu0 0.0
        %1073 = vmatprep.subr.mxu0 0.0
        %1074 = vmatpush1.msra.mxu0 0.0
        %1075 = vmatprep.subr.mxu0 0.0
        %1076 = vmatpush1.msra.mxu0 0.0
        %1077 = vmatprep.subr.mxu0 0.0
        %1078 = vmatpush1.msra.mxu0 0.0
        %1079 = vmatprep.subr.mxu0 0.0
        %1080 = vmatpush1.msra.mxu0 0.0
        %1081 = vmatprep.subr.mxu0 0.0
        %1082 = vmatpush1.msra.mxu0 0.0
        %1083 = vmatprep.subr.mxu0 0.0
        %1084 = vmatpush1.msra.mxu0 0.0
        %1085 = vmatprep.subr.mxu0 0.0
        %1086 = vmatpush1.msra.mxu0 0.0
        %1087 = vmatprep.subr.mxu0 0.0
        %1088 = vmatpush1.msra.mxu0 0.0
        %1089 = vmatprep.subr.mxu0 0.0
        %1090 = vmatpush1.msra.mxu0 0.0
        %1091 = vmatprep.subr.mxu0 0.0
        %1092 = vmatpush1.msra.mxu0 0.0
        %1093 = vmatprep.subr.mxu0 0.0
        %1094 = vmatpush1.msra.mxu0 0.0
        %1095 = vmatprep.subr.mxu0 0.0
        %1096 = vmatpush1.msra.mxu0 0.0
        %1097 = vmatprep.subr.mxu0 0.0
        %1098 = vmatpush1.msra.mxu0 0.0
        %1099 = vmatprep.subr.mxu0 0.0
        %1100 = vmatpush1.msra.mxu0 0.0
        %1101 = vmatprep.subr.mxu0 0.0
        %1102 = vmatpush1.msra.mxu0 0.0
        %1103 = vmatprep.subr.mxu0 0.0
        %1104 = vmatpush1.msra.mxu0 0.0
        %1105 = vmatprep.subr.mxu0 0.0
        %1106 = vmatpush1.msra.mxu0 0.0
        %1107 = vmatprep.subr.mxu0 0.0
        %1108 = vmatpush1.msra.mxu0 0.0
        %1109 = vmatprep.subr.mxu0 0.0
        %1110 = vmatpush1.msra.mxu0 0.0
        %1111 = vmatprep.subr.mxu0 0.0
        %1112 = vmatpush1.msra.mxu0 0.0
        %1113 = vmatprep.subr.mxu0 0.0
        %1114 = vmatpush1.msra.mxu0 0.0
        %1115 = vmatprep.mubr.f32.mxu0 0.0
        %1116 = vmatmul.mubr.f32.gmra.mrb[0].mxu0 %v1049
        %v1117 = vpop.f32.mrb[0].mxu0
        %v1118 = vadd.f32 0.0, %v1117
        %v1119 = vpop.f32.mrb[0].mxu0
        %1120 = vdwg.mxu0
        %1121 = vrot.lane.b32.xlu0 %v542, 104
        %v1122 = vpop.permute.xlu0 %1121
        %1123 = vrot.lane.b32.xlu0 %v539, 72
        %v1124 = vpop.permute.xlu0 %1123
        %v1125 = vsel %vm630, %v1122, 0
        %v1127 = vsel %vm630, %v1124, 0
        %1129 = vmatprep.subr.mxu0 0.0
        %1130 = vmatpush1.xpose.msra.mxu0 %v1127
        %1131 = vmatprep.subr.mxu0 0.0
        %1132 = vmatpush1.xpose.msra.mxu0 0.0
        %1133 = vmatprep.subr.mxu0 0.0
        %1134 = vmatpush1.xpose.msra.mxu0 0.0
        %1135 = vmatprep.subr.mxu0 0.0
        %1136 = vmatpush1.xpose.msra.mxu0 0.0
        %1137 = vmatprep.subr.mxu0 0.0
        %1138 = vmatpush1.xpose.msra.mxu0 0.0
        %1139 = vmatprep.subr.mxu0 0.0
        %1140 = vmatpush1.xpose.msra.mxu0 0.0
        %1141 = vmatprep.subr.mxu0 0.0
        %1142 = vmatpush1.xpose.msra.mxu0 0.0
        %1143 = vmatprep.subr.mxu0 0.0
        %1144 = vmatpush1.xpose.msra.mxu0 0.0
        %1145 = vmatprep.subr.mxu0 0.0
        %1146 = vmatpush1.xpose.msra.mxu0 0.0
        %1147 = vmatprep.subr.mxu0 0.0
        %1148 = vmatpush1.xpose.msra.mxu0 0.0
        %1149 = vmatprep.subr.mxu0 0.0
        %1150 = vmatpush1.xpose.msra.mxu0 0.0
        %1151 = vmatprep.subr.mxu0 0.0
        %1152 = vmatpush1.xpose.msra.mxu0 0.0
        %1153 = vmatprep.subr.mxu0 0.0
        %1154 = vmatpush1.xpose.msra.mxu0 0.0
        %1155 = vmatprep.subr.mxu0 0.0
        %1156 = vmatpush1.xpose.msra.mxu0 0.0
        %1157 = vmatprep.subr.mxu0 0.0
        %1158 = vmatpush1.xpose.msra.mxu0 0.0
        %1159 = vmatprep.subr.mxu0 0.0
        %1160 = vmatpush1.xpose.msra.mxu0 0.0
        %1161 = vmatprep.subr.mxu0 0.0
        %1162 = vmatpush1.xpose.msra.mxu0 0.0
        %1163 = vmatprep.subr.mxu0 0.0
        %1164 = vmatpush1.xpose.msra.mxu0 0.0
        %1165 = vmatprep.subr.mxu0 0.0
        %1166 = vmatpush1.xpose.msra.mxu0 0.0
        %1167 = vmatprep.subr.mxu0 0.0
        %1168 = vmatpush1.xpose.msra.mxu0 0.0
        %1169 = vmatprep.subr.mxu0 0.0
        %1170 = vmatpush1.xpose.msra.mxu0 0.0
        %1171 = vmatprep.subr.mxu0 0.0
        %1172 = vmatpush1.xpose.msra.mxu0 0.0
        %1173 = vmatprep.subr.mxu0 0.0
        %1174 = vmatpush1.xpose.msra.mxu0 0.0
        %1175 = vmatprep.subr.mxu0 0.0
        %1176 = vmatpush1.xpose.msra.mxu0 0.0
        %1177 = vmatprep.subr.mxu0 0.0
        %1178 = vmatpush1.xpose.msra.mxu0 0.0
        %1179 = vmatprep.subr.mxu0 0.0
        %1180 = vmatpush1.xpose.msra.mxu0 0.0
        %1181 = vmatprep.subr.mxu0 0.0
        %1182 = vmatpush1.xpose.msra.mxu0 0.0
        %1183 = vmatprep.subr.mxu0 0.0
        %1184 = vmatpush1.xpose.msra.mxu0 0.0
        %1185 = vmatprep.subr.mxu0 0.0
        %1186 = vmatpush1.xpose.msra.mxu0 0.0
        %1187 = vmatprep.subr.mxu0 0.0
        %1188 = vmatpush1.xpose.msra.mxu0 0.0
        %1189 = vmatprep.subr.mxu0 0.0
        %1190 = vmatpush1.xpose.msra.mxu0 0.0
        %1191 = vmatprep.subr.mxu0 0.0
        %1192 = vmatpush1.xpose.msra.mxu0 0.0
        %1193 = vmatprep.mubr.f32.mxu0 0.0
        %1194 = vmatmul.mubr.f32.gmra.mrb[0].mxu0 %v1125
        %v1195 = vpop.f32.mrb[0].mxu0
        %v1196 = vadd.f32 0.0, %v1195
        %v1197 = vpop.f32.mrb[0].mxu0
        %1198 = vdwg.mxu0
        %v1199 = vsel %vm630, %v1196, -inf
        %1200 = vmax.xlane.f32.xlu0 %v1199
        %v1201 = vpop.xlane.xlu0 %1200
        %v1202 = vsub.f32 %v1196, %v1201
        %v1203 = vmul.f32 %v1202, 1.442695
        %v1204 = vpow.pop %v1203
        %v1205 = vsel %vm630, %v1204, 0.0
        %1206 = vadd.xlane.f32.xlu0 %v1205
        %v1207 = vpop.xlane.xlu0 %1206
        %v1208 = vrcp.pop %v1207
        %v1209 = vmul.f32 %v1204, %v1208
        %1210 = vrot.lane.b32.xlu0 %v624, 104
        %v1211 = vpop.permute.xlu0 %1210
        %v1214 = vsel %vm630, %v1209, 0
        %1216 = vmatprep.subr.mxu0 0.0
        %1217 = vmatpush1.msra.mxu0 %v1211
        %1218 = vmatprep.subr.mxu0 0.0
        %1219 = vmatpush1.msra.mxu0 0.0
        %1220 = vmatprep.subr.mxu0 0.0
        %1221 = vmatpush1.msra.mxu0 0.0
        %1222 = vmatprep.subr.mxu0 0.0
        %1223 = vmatpush1.msra.mxu0 0.0
        %1224 = vmatprep.subr.mxu0 0.0
        %1225 = vmatpush1.msra.mxu0 0.0
        %1226 = vmatprep.subr.mxu0 0.0
        %1227 = vmatpush1.msra.mxu0 0.0
        %1228 = vmatprep.subr.mxu0 0.0
        %1229 = vmatpush1.msra.mxu0 0.0
        %1230 = vmatprep.subr.mxu0 0.0
        %1231 = vmatpush1.msra.mxu0 0.0
        %1232 = vmatprep.subr.mxu0 0.0
        %1233 = vmatpush1.msra.mxu0 0.0
        %1234 = vmatprep.subr.mxu0 0.0
        %1235 = vmatpush1.msra.mxu0 0.0
        %1236 = vmatprep.subr.mxu0 0.0
        %1237 = vmatpush1.msra.mxu0 0.0
        %1238 = vmatprep.subr.mxu0 0.0
        %1239 = vmatpush1.msra.mxu0 0.0
        %1240 = vmatprep.subr.mxu0 0.0
        %1241 = vmatpush1.msra.mxu0 0.0
        %1242 = vmatprep.subr.mxu0 0.0
        %1243 = vmatpush1.msra.mxu0 0.0
        %1244 = vmatprep.subr.mxu0 0.0
        %1245 = vmatpush1.msra.mxu0 0.0
        %1246 = vmatprep.subr.mxu0 0.0
        %1247 = vmatpush1.msra.mxu0 0.0
        %1248 = vmatprep.subr.mxu0 0.0
        %1249 = vmatpush1.msra.mxu0 0.0
        %1250 = vmatprep.subr.mxu0 0.0
        %1251 = vmatpush1.msra.mxu0 0.0
        %1252 = vmatprep.subr.mxu0 0.0
        %1253 = vmatpush1.msra.mxu0 0.0
        %1254 = vmatprep.subr.mxu0 0.0
        %1255 = vmatpush1.msra.mxu0 0.0
        %1256 = vmatprep.subr.mxu0 0.0
        %1257 = vmatpush1.msra.mxu0 0.0
        %1258 = vmatprep.subr.mxu0 0.0
        %1259 = vmatpush1.msra.mxu0 0.0
        %1260 = vmatprep.subr.mxu0 0.0
        %1261 = vmatpush1.msra.mxu0 0.0
        %1262 = vmatprep.subr.mxu0 0.0
        %1263 = vmatpush1.msra.mxu0 0.0
        %1264 = vmatprep.subr.mxu0 0.0
        %1265 = vmatpush1.msra.mxu0 0.0
        %1266 = vmatprep.subr.mxu0 0.0
        %1267 = vmatpush1.msra.mxu0 0.0
        %1268 = vmatprep.subr.mxu0 0.0
        %1269 = vmatpush1.msra.mxu0 0.0
        %1270 = vmatprep.subr.mxu0 0.0
        %1271 = vmatpush1.msra.mxu0 0.0
        %1272 = vmatprep.subr.mxu0 0.0
        %1273 = vmatpush1.msra.mxu0 0.0
        %1274 = vmatprep.subr.mxu0 0.0
        %1275 = vmatpush1.msra.mxu0 0.0
        %1276 = vmatprep.subr.mxu0 0.0
        %1277 = vmatpush1.msra.mxu0 0.0
        %1278 = vmatprep.subr.mxu0 0.0
        %1279 = vmatpush1.msra.mxu0 0.0
        %1280 = vmatprep.mubr.f32.mxu0 0.0
        %1281 = vmatmul.mubr.f32.gmra.mrb[0].mxu0 %v1214
        %v1282 = vpop.f32.mrb[0].mxu0
        %v1283 = vadd.f32 0.0, %v1282
        %v1284 = vpop.f32.mrb[0].mxu0
        %1285 = vdwg.mxu0
        %1287 = vrot.lane.b32.xlu0 %v953, 8
        %v1288 = vpop.permute.xlu0 %1287
        %1291 = vrot.lane.b32.xlu0 %v1118, 16
        %v1292 = vpop.permute.xlu0 %1291
        %1295 = vrot.lane.b32.xlu0 %v1283, 24
        %v1296 = vpop.permute.xlu0 %1295
        %v1298 = vsel %vm630, %v787, %v1288
        %vm1299 = vcmask 130048
        %v1300 = vsel %vm1299, %v1298, %v1292
        %vm1301 = vcmask 195584
        %v1302 = vsel %vm1301, %v1300, %v1296
        %v1303 = vld [vmem:[#allocation10] sm:$0xff]
        %v1304 = vld [vmem:[#allocation10 + $0x8] sm:$0xff]
        %v1305 = vld [vmem:[#allocation10 + $0x10] sm:$0xff]
        %v1306 = vld [vmem:[#allocation10 + $0x18] sm:$0xff]
        %v1307 = vld [vmem:[%s7] sm:$0x1]
        %v1309 = vlaneseq
        %v1310 = vshrl.u32 %v1309, 7
        %v1311 = vsub.s32 0, %v1310
        %v1312 = vrot.slane %v1307, %v1311
        %v1315 = vsel %vm468, %v1302, 0
        %1317 = vmatprep.subr.mxu0 0.0
        %1318 = vmatpush1.msra.mxu0 %v1303
        %1319 = vmatprep.subr.mxu0 0.0
        %1320 = vmatpush1.msra.mxu0 %v1304
        %1321 = vmatprep.subr.mxu0 0.0
        %1322 = vmatpush1.msra.mxu0 %v1305
        %1323 = vmatprep.subr.mxu0 0.0
        %1324 = vmatpush1.msra.mxu0 %v1306
        %1325 = vmatprep.subr.mxu0 0.0
        %1326 = vmatpush1.msra.mxu0 0.0
        %1327 = vmatprep.subr.mxu0 0.0
        %1328 = vmatpush1.msra.mxu0 0.0
        %1329 = vmatprep.subr.mxu0 0.0
        %1330 = vmatpush1.msra.mxu0 0.0
        %1331 = vmatprep.subr.mxu0 0.0
        %1332 = vmatpush1.msra.mxu0 0.0
        %1333 = vmatprep.subr.mxu0 0.0
        %1334 = vmatpush1.msra.mxu0 0.0
        %1335 = vmatprep.subr.mxu0 0.0
        %1336 = vmatpush1.msra.mxu0 0.0
        %1337 = vmatprep.subr.mxu0 0.0
        %1338 = vmatpush1.msra.mxu0 0.0
        %1339 = vmatprep.subr.mxu0 0.0
        %1340 = vmatpush1.msra.mxu0 0.0
        %1341 = vmatprep.subr.mxu0 0.0
        %1342 = vmatpush1.msra.mxu0 0.0
        %1343 = vmatprep.subr.mxu0 0.0
        %1344 = vmatpush1.msra.mxu0 0.0
        %1345 = vmatprep.subr.mxu0 0.0
        %1346 = vmatpush1.msra.mxu0 0.0
        %1347 = vmatprep.subr.mxu0 0.0
        %1348 = vmatpush1.msra.mxu0 0.0
        %1349 = vmatprep.subr.mxu0 0.0
        %1350 = vmatpush1.msra.mxu0 0.0
        %1351 = vmatprep.subr.mxu0 0.0
        %1352 = vmatpush1.msra.mxu0 0.0
        %1353 = vmatprep.subr.mxu0 0.0
        %1354 = vmatpush1.msra.mxu0 0.0
        %1355 = vmatprep.subr.mxu0 0.0
        %1356 = vmatpush1.msra.mxu0 0.0
        %1357 = vmatprep.subr.mxu0 0.0
        %1358 = vmatpush1.msra.mxu0 0.0
        %1359 = vmatprep.subr.mxu0 0.0
        %1360 = vmatpush1.msra.mxu0 0.0
        %1361 = vmatprep.subr.mxu0 0.0
        %1362 = vmatpush1.msra.mxu0 0.0
        %1363 = vmatprep.subr.mxu0 0.0
        %1364 = vmatpush1.msra.mxu0 0.0
        %1365 = vmatprep.subr.mxu0 0.0
        %1366 = vmatpush1.msra.mxu0 0.0
        %1367 = vmatprep.subr.mxu0 0.0
        %1368 = vmatpush1.msra.mxu0 0.0
        %1369 = vmatprep.subr.mxu0 0.0
        %1370 = vmatpush1.msra.mxu0 0.0
        %1371 = vmatprep.subr.mxu0 0.0
        %1372 = vmatpush1.msra.mxu0 0.0
        %1373 = vmatprep.subr.mxu0 0.0
        %1374 = vmatpush1.msra.mxu0 0.0
        %1375 = vmatprep.subr.mxu0 0.0
        %1376 = vmatpush1.msra.mxu0 0.0
        %1377 = vmatprep.subr.mxu0 0.0
        %1378 = vmatpush1.msra.mxu0 0.0
        %1379 = vmatprep.subr.mxu0 0.0
        %1380 = vmatpush1.msra.mxu0 0.0
        %1381 = vmatprep.mubr.f32.mxu0 0.0
        %1382 = vmatmul.mubr.f32.gmra.mrb[0].mxu0 %v1315
        %v1383 = vpop.f32.mrb[0].mxu0
        %v1384 = vadd.f32 %v1312, %v1383
        %v1385 = vpop.f32.mrb[0].mxu0
        %1386 = vdwg.mxu0
        %v1387 = vadd.f32 %v456, %v1384
        %v1388 = vld [vmem:[%s8] sm:$0x1]
        %v1389 = vld [vmem:[%s9] sm:$0x1]
        %v1390 = vsel %vm468, %v1387, 0.0
        %1391 = vadd.xlane.f32.xlu0 %v1390
        %v1392 = vpop.xlane.xlu0 %1391
        %v1393 = vrcp.pop 32.0
        %v1394 = vmul.f32 %v1392, %v1393
        %v1395 = vsub.f32 %v1387, %v1394
        %v1396 = vmul.f32 %v1395, %v1395
        %v1397 = vsel %vm468, %v1396, 0.0
        %1398 = vadd.xlane.f32.xlu0 %v1397
        %v1399 = vpop.xlane.xlu0 %1398
        %v1400 = vmul.f32 %v1399, %v1393
        %v1401 = vadd.f32 %v1400, 1e-05
        %v1402 = vrsqrt.pop %v1401
        %v1403 = vmul.f32 %v1395, %v1402
        %v1405 = vlaneseq
        %v1406 = vshrl.u32 %v1405, 7
        %v1407 = vsub.s32 0, %v1406
        %v1408 = vrot.slane %v1388, %v1407
        %v1410 = vmul.f32 %v1403, %v1408
        %v1412 = vlaneseq
        %v1413 = vshrl.u32 %v1412, 7
        %v1414 = vsub.s32 0, %v1413
        %v1415 = vrot.slane %v1389, %v1414
        %v1417 = vadd.f32 %v1410, %v1415
        %1418 = vst.msk [vmem:[%s454] sm:$0xff] %vm468, %v1417
        %s1419 = sand.u32 %s259, 1
        %s1420 = scalar_lea.sflag [#allocation4], %s1419
        %s1421 = sand.u32 %s259, 1
        %s1422 = smul.addr %s1421, 8
        %s1423 = scalar_lea.vmem [#allocation11], %s1422
        // Predicated region
        $region81: #{tpu_custom_call.1} parent=59 // pred_check
          %p1424 = pneg %p269
        $region82: #{tpu_custom_call.1} parent=59 // pred_check_branch
          %1426 = sbr.rel (%p1424) target = $region84
        $region83: #{tpu_custom_call.1} parent=59 // pred_region
          %s1428 = ssub.s32 128, 128
          %1429 = vsyncadd %s1420, %s1428
          %s1430 = smul.addr %s31, 128
          %s1431 = scalar_lea.hbm %s10, %s1430
          %s1433 = sshll.u32 %s1423, 4
          %s1434 = int_to_ptr.vmem [resolvable:$true] %s1433
          %1436 = dma.vmem_to_hbm [thread:$0]  %s1434, 128, %s1431, %s1420
        $region84: #{tpu_custom_call.1} parent=59 // pred_fallthru
          _
      $region60: #{tpu_custom_call.1} parent=5 // pred_fallthru
        _
      %p1437 = scmp.le.s32.totalorder 2, %s26
      // Predicated region
      $region85: #{tpu_custom_call.1} parent=5 // pred_check
        %p1438 = pneg %p1437
      $region86: #{tpu_custom_call.1} parent=5 // pred_check_branch
        %1440 = sbr.rel (%p1438) target = $region88
      $region87: #{tpu_custom_call.1} parent=5 // pred_region
        %s1441 = ssub.s32 %s26, 2
        // Predicated region
        $region89: #{tpu_custom_call.1} parent=87 // pred_check
          %p1442 = pneg %p275
        $region90: #{tpu_custom_call.1} parent=87 // pred_check_branch
          %1444 = sbr.rel (%p1442) target = $region92
        $region91: #{tpu_custom_call.1} parent=87 // pred_region
          %s1445 = sand.u32 %s260, 1
          %s1446 = scalar_lea.sflag [#allocation4], %s1445
          %s1447 = sand.u32 %s260, 1
          %s1448 = smul.addr %s1447, 8
          %s1449 = scalar_lea.vmem [#allocation11], %s1448
          %1450 = dma.done %s1446, 128
        $region92: #{tpu_custom_call.1} parent=87 // pred_fallthru
          _
      $region88: #{tpu_custom_call.1} parent=5 // pred_fallthru
        _
    $region6: #{tpu_custom_call.1} parent=1 // loop_footer
      %s30 = sadd.s32 1, %s26
    $region7: #{tpu_custom_call.1} parent=1 // loop_footer_branch
      %25 = sbr.rel target = $region3
    $region8: #{tpu_custom_call.1} parent=1 // loop_exit
      _
    %1451 = vsyncpa [#allocation3], 1
    %s1452 = scalar_lea.sflag [#allocation3], 1
    %1453 = vsyncpa %s1452, 1
    %1454 = vsyncpa [#allocation6], 1
    %s1455 = scalar_lea.sflag [#allocation6], 1
    %1456 = vsyncpa %s1455, 1
    %1457 = vsyncpa [#allocation9], 1
    %1458 = vsyncpa [#allocation4], 1
    %s1459 = scalar_lea.sflag [#allocation4], 1
    %1460 = vsyncpa %s1459, 1

</llo_original>
